<compile_context>
chip_gen: v5e
topology: v5e:2x2
jax: 0.10.0
libtpu: 0.0.40
codegen_flags: <defaults>
</compile_context>

<pallas_src>
import jax
import jax.numpy as jnp
from jax.experimental import pallas as pl
from jax.experimental.pallas import tpu as pltpu

# Module hyper-parameters (defaults of VQVGAE.__init__)
NFEAT, NLAYER, NHID, NLATENT, NNODE, NCOND, NEMB = 1, 2, 32, 16, 8, 3, 64
LN_EPS = 1e-5  # nn.LayerNorm default eps

# fused output slab layout (32 f32 lanes per sample)
SLAB_W = 32
Z_OFF = 0                      # lanes [0, 16)  : z
PRED_OFF = NLATENT             # lanes [16, 19) : pred
IDX_OFF = PRED_OFF + NCOND     # lane  19       : nearest-codebook index (f32)

# rows of the packed parameter-vector slab
(ROW_B0, ROW_G0, ROW_BE0, ROW_B1, ROW_G1, ROW_BE1,
 ROW_W0, ROW_BC1, ROW_BFC, ROW_BC2) = range(10)
VEC_ROWS = 16                  # padded to a sublane multiple


def _ln_relu(h, gamma, beta):
    # h: (BB, NHID); gamma/beta: (1, NHID).  Matches nn.LayerNorm (biased var).
    mean = jnp.mean(h, axis=-1, keepdims=True)
    var = jnp.mean((h - mean) ** 2, axis=-1, keepdims=True)
    y = (h - mean) * jax.lax.rsqrt(var + LN_EPS) * gamma + beta
    return jnp.maximum(y, 0.0)


def vqvgae_kernel(adj_ref, feat_ref, vec_ref, w1_ref, wfc_ref, wc1_ref,
                  wc2_ref, et_ref, out_ref):
    adj = adj_ref[...]                     # (BB, 64)  row-major [dst*8 + src]
    feat = feat_ref[...]                   # (BB, 8)   (NFEAT == 1 squeezed)
    v = vec_ref[...]                       # (16, 32)  packed small vectors

    b0, g0, be0 = v[ROW_B0:ROW_B0 + 1], v[ROW_G0:ROW_G0 + 1], v[ROW_BE0:ROW_BE0 + 1]
    b1, g1, be1 = v[ROW_B1:ROW_B1 + 1], v[ROW_G1:ROW_G1 + 1], v[ROW_BE1:ROW_BE1 + 1]
    w0row = v[ROW_W0:ROW_W0 + 1]                      # (1, 32) GCN-0 weight row
    bc1 = v[ROW_BC1:ROW_BC1 + 1, 0:NLATENT]           # (1, 16)
    bfc = v[ROW_BFC:ROW_BFC + 1]                      # (1, 32), lanes [0:16)
    bc2 = v[ROW_BC2:ROW_BC2 + 1]                      # (1, 32), lanes [16:19)

    # --- GCN layer 0 (rank-1: support0[m] = feat[:, m] * w0row) --------------
    # out[:, i, :] = (sum_m A[:, i, m] * feat[:, m]) * w0row  -- aggregate on
    # narrow columns first, then a single 32-wide broadcast per node.
    x = []
    for i in range(NNODE):
        a = adj[:, i * NNODE:(i + 1) * NNODE]                  # (BB, 8)
        agg = jnp.sum(a * feat, axis=1, keepdims=True)         # (BB, 1)
        x.append(_ln_relu(agg * w0row + b0, g0, be0))          # (BB, 32)
    # dropout ratio == 0 -> identity

    # --- GCN layer 1 ----------------------------------------------------------
    w1 = w1_ref[...]
    s1 = [jnp.dot(x[m], w1, preferred_element_type=jnp.float32)
          for m in range(NNODE)]                               # each (BB, 32)
    y = []
    for i in range(NNODE):
        a = adj[:, i * NNODE:(i + 1) * NNODE]
        h = a[:, 0:1] * s1[0]
        for m in range(1, NNODE):
            h = h + a[:, m:m + 1] * s1[m]
        y.append(_ln_relu(h + b1, g1, be1))

    # --- fc: z = flatten(y) @ Wfc + bfc  (Wfc zero-padded into slab lanes) ----
    # Kept as 8 K=32 dots; fusing into one K=256 dot (a v6e/v7x MXU micro-opt)
    # would need an unaligned lane concatenate and this kernel is HBM-bound.
    acc = jnp.dot(y[0], wfc_ref[0], preferred_element_type=jnp.float32)
    for n in range(1, NNODE):
        acc = acc + jnp.dot(y[n], wfc_ref[n], preferred_element_type=jnp.float32)
    z_slab = acc + bfc                                          # (BB, 32)
    z = z_slab[:, Z_OFF:Z_OFF + NLATENT]                        # (BB, 16)

    # --- condition regressor: Linear -> ReLU -> Linear -> ReLU ----------------
    h1 = jnp.maximum(
        jnp.dot(z, wc1_ref[...], preferred_element_type=jnp.float32) + bc1, 0.0)
    # wc2/bc2 zero-padded into lanes [16:19); ReLU(0) == 0 elsewhere.
    pred_slab = jnp.maximum(
        jnp.dot(h1, wc2_ref[...], preferred_element_type=jnp.float32) + bc2, 0.0)

    # --- vector quantizer: nearest-codebook index ------------------------------
    et = et_ref[...]                                            # (16, 64) = E^T
    z_sq = jnp.sum(z * z, axis=1, keepdims=True)                # (BB, 1)
    e_sq = jnp.sum(et * et, axis=0, keepdims=True)              # (1, 64)
    dist = z_sq + e_sq - 2.0 * jnp.dot(z, et, preferred_element_type=jnp.float32)
    min_val = jnp.min(dist, axis=1, keepdims=True)
    code = jax.lax.broadcasted_iota(jnp.int32, dist.shape, 1)
    # first index attaining the minimum (matches torch.argmin tie-break)
    idx = jnp.min(jnp.where(dist == min_val, code, NEMB), axis=1, keepdims=True)

    lane = jax.lax.broadcasted_iota(jnp.int32, z_slab.shape, 1)  # (BB, 32)
    idx_slab = jnp.where(lane == IDX_OFF, idx.astype(jnp.float32), 0.0)

    # single lane-dense (BB, 32) store: z | pred | idx | zero pad
    out_ref[...] = z_slab + pred_slab + idx_slab


def _round_up(x, m):
    return ((x + m - 1) // m) * m


def vqvgae_forward(adjacency, features, params, *, block_b=1024):
    """adjacency: (B, N, N); features: (B, N, 1). Returns (z, pred, encodings)."""
    (w0, b0, g0, be0, w1, b1, g1, be1, wfc, bfc, wc1, bc1, wc2, bc2, et) = params
    B = adjacency.shape[0]

    # zero-copy reshapes (no transpose, no pad-to-block-size)
    adj2d = adjacency.astype(jnp.float32).reshape(B, NNODE * NNODE)
    feat2d = features.astype(jnp.float32).reshape(B, NNODE * NFEAT)

    # big batch tile (amortize per-step pipeline overhead), but keep >= 2 grid
    # steps when possible so both v7x TensorCores get work
    BB = max(8, min(block_b, _round_up(pl.cdiv(B, 2), 8)))
    # tiny (< 8 row) pad only when B is not a sublane multiple; pad rows are
    # row-independent and discarded below
    B_pad = _round_up(B, 8)
    if B_pad != B:
        adj2d = jnp.pad(adj2d, ((0, B_pad - B), (0, 0)))
        feat2d = jnp.pad(feat2d, ((0, B_pad - B), (0, 0)))
    grid = (pl.cdiv(B_pad, BB),)

    # ---- pack the small parameter vectors into one (16, 32) slab -------------
    vecs = jnp.zeros((VEC_ROWS, SLAB_W), jnp.float32)
    vecs = vecs.at[ROW_B0, :NHID].set(b0.reshape(-1))
    vecs = vecs.at[ROW_G0, :NHID].set(g0.reshape(-1))
    vecs = vecs.at[ROW_BE0, :NHID].set(be0.reshape(-1))
    vecs = vecs.at[ROW_B1, :NHID].set(b1.reshape(-1))
    vecs = vecs.at[ROW_G1, :NHID].set(g1.reshape(-1))
    vecs = vecs.at[ROW_BE1, :NHID].set(be1.reshape(-1))
    vecs = vecs.at[ROW_W0, :NHID].set(w0.reshape(-1))           # GCN-0 weight
    vecs = vecs.at[ROW_BC1, :NLATENT].set(bc1.reshape(-1))
    vecs = vecs.at[ROW_BFC, Z_OFF:Z_OFF + NLATENT].set(bfc.reshape(-1))
    vecs = vecs.at[ROW_BC2, PRED_OFF:PRED_OFF + NCOND].set(bc2.reshape(-1))

    # fc / regressor output weights zero-padded into the 32-lane slab layout
    wfc_p = jnp.zeros((NNODE, NHID, SLAB_W), jnp.float32
                      ).at[:, :, Z_OFF:Z_OFF + NLATENT].set(wfc)
    wc2_p = jnp.zeros((NLATENT, SLAB_W), jnp.float32
                      ).at[:, PRED_OFF:PRED_OFF + NCOND].set(wc2)

    in_specs = [
        pl.BlockSpec((BB, NNODE * NNODE), lambda b: (b, 0)),      # adjacency
        pl.BlockSpec((BB, NNODE * NFEAT), lambda b: (b, 0)),      # features
        pl.BlockSpec((VEC_ROWS, SLAB_W), lambda b: (0, 0)),       # packed vecs
        pl.BlockSpec(w1.shape, lambda b: (0, 0)),                 # (32, 32)
        pl.BlockSpec(wfc_p.shape, lambda b: (0, 0, 0)),           # (8, 32, 32)
        pl.BlockSpec(wc1.shape, lambda b: (0, 0)),                # (16, 16)
        pl.BlockSpec(wc2_p.shape, lambda b: (0, 0)),              # (16, 32)
        pl.BlockSpec(et.shape, lambda b: (0, 0)),                 # (16, 64)
    ]
    out_spec = pl.BlockSpec((BB, SLAB_W), lambda b: (b, 0))
    out_shape = jax.ShapeDtypeStruct((B_pad, SLAB_W), jnp.float32)

    out = pl.pallas_call(
        vqvgae_kernel,
        out_shape=out_shape,
        grid_spec=pltpu.PrefetchScalarGridSpec(
            num_scalar_prefetch=0,
            grid=grid,
            in_specs=in_specs,
            out_specs=out_spec),
        compiler_params=pltpu.CompilerParams(
            dimension_semantics=("parallel",)),
    )(adj2d, feat2d, vecs, w1, wfc_p, wc1, wc2_p, et)

    z = out[:B, Z_OFF:Z_OFF + NLATENT]
    pred = out[:B, PRED_OFF:PRED_OFF + NCOND]
    idx = out[:B, IDX_OFF].astype(jnp.int32)
    encodings = jax.nn.one_hot(idx, NEMB, dtype=jnp.float32)   # built host-side
    return z, pred, encodings


def init_params(key):
    ks = jax.random.split(key, 12)
    w0 = 0.3 * jax.random.normal(ks[0], (NFEAT, NHID), jnp.float32)
    b0 = 0.1 * jax.random.normal(ks[1], (1, NHID), jnp.float32)
    g0 = jnp.ones((1, NHID), jnp.float32)      # LayerNorm weight
    be0 = jnp.zeros((1, NHID), jnp.float32)    # LayerNorm bias
    w1 = 0.2 * jax.random.normal(ks[2], (NHID, NHID), jnp.float32)
    b1 = 0.1 * jax.random.normal(ks[3], (1, NHID), jnp.float32)
    g1 = jnp.ones((1, NHID), jnp.float32)
    be1 = jnp.zeros((1, NHID), jnp.float32)
    # fc: Linear(NHID*NNODE -> NLATENT); W^T reshaped to (N, HID, L) node-major
    wfc = 0.1 * jax.random.normal(ks[4], (NNODE, NHID, NLATENT), jnp.float32)
    bfc = 0.1 * jax.random.normal(ks[5], (1, NLATENT), jnp.float32)
    # condition regressor
    wc1 = 0.2 * jax.random.normal(ks[6], (NLATENT, NLATENT), jnp.float32)
    bc1 = 0.1 * jax.random.normal(ks[7], (1, NLATENT), jnp.float32)
    wc2 = 0.2 * jax.random.normal(ks[8], (NLATENT, NCOND), jnp.float32)
    bc2 = 0.1 * jax.random.normal(ks[9], (1, NCOND), jnp.float32)
    # VQ-EMA codebook, normal_() init; passed transposed (L, K)
    et = jax.random.normal(ks[10], (NLATENT, NEMB), jnp.float32)
    return (w0, b0, g0, be0, w1, b1, g1, be1, wfc, bfc, wc1, bc1, wc2, bc2, et)


def reference_forward(adjacency, features, params):
    (w0, b0, g0, be0, w1, b1, g1, be1, wfc, bfc, wc1, bc1, wc2, bc2, et) = params
    B = adjacency.shape[0]
    hp = jax.lax.Precision.HIGHEST

    def ln_relu(h, g, be):
        m = jnp.mean(h, axis=-1, keepdims=True)
        v = jnp.mean((h - m) ** 2, axis=-1, keepdims=True)
        return jnp.maximum((h - m) / jnp.sqrt(v + LN_EPS) * g + be, 0.0)

    x = ln_relu(jnp.einsum('bnm,bmh->bnh', adjacency,
                           jnp.einsum('bnf,fh->bnh', features, w0, precision=hp),
                           precision=hp) + b0, g0, be0)
    x = ln_relu(jnp.einsum('bnm,bmh->bnh', adjacency,
                           jnp.einsum('bnh,hk->bnk', x, w1, precision=hp),
                           precision=hp) + b1, g1, be1)
    z = jnp.dot(x.reshape(B, NNODE * NHID), wfc.reshape(NNODE * NHID, NLATENT),
                precision=hp) + bfc
    pred = jnp.maximum(
        jnp.dot(jnp.maximum(jnp.dot(z, wc1, precision=hp) + bc1, 0.0),
                wc2, precision=hp) + bc2, 0.0)
    dist = (jnp.sum(z * z, axis=1, keepdims=True)
            + jnp.sum(et * et, axis=0, keepdims=True)
            - 2.0 * jnp.dot(z, et, precision=hp))
    idx = jnp.argmin(dist, axis=1)
    enc = jax.nn.one_hot(idx, NEMB, dtype=jnp.float32)
    return z, pred, enc


if __name__ == "__main__":
    root = jax.random.PRNGKey(0)
    kp, kdata = jax.random.split(root)
    params = init_params(kp)
    et = params[-1]

    # case 0: B=2  -> tiny pad to 8 rows, single grid step
    # case 1: B=24 -> no pad, 2 grid steps with a partial last block
    for case, B in enumerate((2, 24)):
        ka, kf = jax.random.split(jax.random.fold_in(kdata, case))
        adjacency = (jax.random.uniform(ka, (B, NNODE, NNODE), jnp.float32) > 0.5
                     ).astype(jnp.float32)
        features = jax.random.normal(kf, (B, NNODE, NFEAT), jnp.float32)

        z, pred, enc = vqvgae_forward(adjacency, features, params)
        jax.block_until_ready((z, pred, enc))

        z_ref, pred_ref, enc_ref = reference_forward(adjacency, features, params)
        assert z.shape == (B, NLATENT) and pred.shape == (B, NCOND)
        assert enc.shape == (B, NEMB)
        # float32 kernel (module is float64) + differing matmul summation order
        assert jnp.allclose(z, z_ref, atol=5e-3, rtol=5e-3), f"z mismatch (B={B})"
        assert jnp.allclose(pred, pred_ref, atol=5e-3, rtol=5e-3), f"pred mismatch (B={B})"
        # encodings: each row must be one-hot and select a codebook entry whose
        # distance is the minimum (within fp tolerance, robust to argmin near-ties)
        assert jnp.all(jnp.sum(enc, axis=1) == 1.0), f"encodings not one-hot (B={B})"
        dist = (jnp.sum(z_ref * z_ref, axis=1, keepdims=True)
                + jnp.sum(et * et, axis=0, keepdims=True)
                - 2.0 * jnp.dot(z_ref, et, precision=jax.lax.Precision.HIGHEST))
        picked = jnp.sum(dist * enc, axis=1)
        assert jnp.all(picked <= jnp.min(dist, axis=1) + 1e-2), f"encodings mismatch (B={B})"

    print("KERNEL_OK")
</pallas_src>

<mosaic_0001>
module attributes {stable_mosaic.version = 11 : i64} {
  func.func @vqvgae_kernel(%arg0: i32, %arg1: memref<8x64xf32, #tpu.memory_space<vmem>>, %arg2: memref<8x8xf32, #tpu.memory_space<vmem>>, %arg3: memref<16x32xf32, #tpu.memory_space<vmem>>, %arg4: memref<32x32xf32, #tpu.memory_space<vmem>>, %arg5: memref<8x32x32xf32, #tpu.memory_space<vmem>>, %arg6: memref<16x16xf32, #tpu.memory_space<vmem>>, %arg7: memref<16x32xf32, #tpu.memory_space<vmem>>, %arg8: memref<16x64xf32, #tpu.memory_space<vmem>>, %arg9: memref<8x32xf32, #tpu.memory_space<vmem>>) attributes {dimension_semantics = [#tpu.dimension_semantics<parallel>], iteration_bounds = array<i64: 1>, scalar_prefetch = 0 : i64, scratch_operands = 0 : i64, tpu.core_type = #tpu.core_type<tc>, window_params = [{transform_indices = @transform_0, window_bounds = array<i64: 8, 64>}, {transform_indices = @transform_1, window_bounds = array<i64: 8, 8>}, {pipeline_mode = #tpu.pipeline_mode<synchronous>, transform_indices = @transform_2, window_bounds = array<i64: 16, 32>}, {pipeline_mode = #tpu.pipeline_mode<synchronous>, transform_indices = @transform_3, window_bounds = array<i64: 32, 32>}, {pipeline_mode = #tpu.pipeline_mode<synchronous>, transform_indices = @transform_4, window_bounds = array<i64: 8, 32, 32>}, {pipeline_mode = #tpu.pipeline_mode<synchronous>, transform_indices = @transform_5, window_bounds = array<i64: 16, 16>}, {pipeline_mode = #tpu.pipeline_mode<synchronous>, transform_indices = @transform_6, window_bounds = array<i64: 16, 32>}, {pipeline_mode = #tpu.pipeline_mode<synchronous>, transform_indices = @transform_7, window_bounds = array<i64: 16, 64>}, {transform_indices = @transform_8, window_bounds = array<i64: 8, 32>}]} {
    %c0 = arith.constant 0 : index
    %c0_0 = arith.constant 0 : index
    %0 = vector.load %arg1[%c0, %c0_0] : memref<8x64xf32, #tpu.memory_space<vmem>>, vector<8x64xf32>
    %c0_1 = arith.constant 0 : index
    %c0_2 = arith.constant 0 : index
    %1 = vector.load %arg2[%c0_1, %c0_2] : memref<8x8xf32, #tpu.memory_space<vmem>>, vector<8x8xf32>
    %c0_3 = arith.constant 0 : index
    %c0_4 = arith.constant 0 : index
    %2 = vector.load %arg3[%c0_3, %c0_4] : memref<16x32xf32, #tpu.memory_space<vmem>>, vector<16x32xf32>
    %3 = vector.extract_strided_slice %2 {offsets = [0, 0], sizes = [1, 32], strides = [1, 1]} : vector<16x32xf32> to vector<1x32xf32>
    %4 = vector.extract_strided_slice %2 {offsets = [1, 0], sizes = [1, 32], strides = [1, 1]} : vector<16x32xf32> to vector<1x32xf32>
    %5 = vector.extract_strided_slice %2 {offsets = [2, 0], sizes = [1, 32], strides = [1, 1]} : vector<16x32xf32> to vector<1x32xf32>
    %6 = vector.extract_strided_slice %2 {offsets = [3, 0], sizes = [1, 32], strides = [1, 1]} : vector<16x32xf32> to vector<1x32xf32>
    %7 = vector.extract_strided_slice %2 {offsets = [4, 0], sizes = [1, 32], strides = [1, 1]} : vector<16x32xf32> to vector<1x32xf32>
    %8 = vector.extract_strided_slice %2 {offsets = [5, 0], sizes = [1, 32], strides = [1, 1]} : vector<16x32xf32> to vector<1x32xf32>
    %9 = vector.extract_strided_slice %2 {offsets = [6, 0], sizes = [1, 32], strides = [1, 1]} : vector<16x32xf32> to vector<1x32xf32>
    %10 = vector.extract_strided_slice %2 {offsets = [7, 0], sizes = [1, 16], strides = [1, 1]} : vector<16x32xf32> to vector<1x16xf32>
    %11 = vector.extract_strided_slice %2 {offsets = [8, 0], sizes = [1, 32], strides = [1, 1]} : vector<16x32xf32> to vector<1x32xf32>
    %12 = vector.extract_strided_slice %2 {offsets = [9, 0], sizes = [1, 32], strides = [1, 1]} : vector<16x32xf32> to vector<1x32xf32>
    %13 = vector.extract_strided_slice %0 {offsets = [0, 0], sizes = [8, 8], strides = [1, 1]} : vector<8x64xf32> to vector<8x8xf32>
    %14 = arith.mulf %13, %1 : vector<8x8xf32>
    %cst = arith.constant dense<0.000000e+00> : vector<8xf32>
    %15 = vector.multi_reduction <add>, %14, %cst [1] : vector<8x8xf32> to vector<8xf32>
    %16 = vector.shape_cast %15 : vector<8xf32> to vector<8x1xf32>
    %17 = vector.broadcast %16 : vector<8x1xf32> to vector<8x32xf32>
    %18 = vector.broadcast %9 : vector<1x32xf32> to vector<8x32xf32>
    %19 = arith.mulf %17, %18 : vector<8x32xf32>
    %20 = vector.broadcast %3 : vector<1x32xf32> to vector<8x32xf32>
    %21 = arith.addf %19, %20 : vector<8x32xf32>
    %cst_5 = arith.constant dense<0.000000e+00> : vector<8xf32>
    %22 = vector.multi_reduction <add>, %21, %cst_5 [1] : vector<8x32xf32> to vector<8xf32>
    %23 = vector.shape_cast %22 : vector<8xf32> to vector<8x1xf32>
    %cst_6 = arith.constant 3.200000e+01 : f32
    %24 = vector.broadcast %cst_6 : f32 to vector<8x1xf32>
    %25 = arith.divf %23, %24 : vector<8x1xf32>
    %26 = vector.broadcast %25 : vector<8x1xf32> to vector<8x32xf32>
    %27 = arith.subf %21, %26 : vector<8x32xf32>
    %28 = arith.mulf %27, %27 : vector<8x32xf32>
    %cst_7 = arith.constant dense<0.000000e+00> : vector<8xf32>
    %29 = vector.multi_reduction <add>, %28, %cst_7 [1] : vector<8x32xf32> to vector<8xf32>
    %30 = vector.shape_cast %29 : vector<8xf32> to vector<8x1xf32>
    %cst_8 = arith.constant 3.200000e+01 : f32
    %31 = vector.broadcast %cst_8 : f32 to vector<8x1xf32>
    %32 = arith.divf %30, %31 : vector<8x1xf32>
    %33 = vector.broadcast %25 : vector<8x1xf32> to vector<8x32xf32>
    %34 = arith.subf %21, %33 : vector<8x32xf32>
    %cst_9 = arith.constant 9.99999974E-6 : f32
    %35 = vector.broadcast %cst_9 : f32 to vector<8x1xf32>
    %36 = arith.addf %32, %35 : vector<8x1xf32>
    %37 = math.rsqrt %36 : vector<8x1xf32>
    %38 = vector.broadcast %37 : vector<8x1xf32> to vector<8x32xf32>
    %39 = arith.mulf %34, %38 : vector<8x32xf32>
    %40 = vector.broadcast %4 : vector<1x32xf32> to vector<8x32xf32>
    %41 = arith.mulf %39, %40 : vector<8x32xf32>
    %42 = vector.broadcast %5 : vector<1x32xf32> to vector<8x32xf32>
    %43 = arith.addf %41, %42 : vector<8x32xf32>
    %cst_10 = arith.constant 0.000000e+00 : f32
    %44 = vector.broadcast %cst_10 : f32 to vector<8x32xf32>
    %45 = arith.maximumf %43, %44 : vector<8x32xf32>
    %46 = vector.extract_strided_slice %0 {offsets = [0, 8], sizes = [8, 8], strides = [1, 1]} : vector<8x64xf32> to vector<8x8xf32>
    %47 = arith.mulf %46, %1 : vector<8x8xf32>
    %cst_11 = arith.constant dense<0.000000e+00> : vector<8xf32>
    %48 = vector.multi_reduction <add>, %47, %cst_11 [1] : vector<8x8xf32> to vector<8xf32>
    %49 = vector.shape_cast %48 : vector<8xf32> to vector<8x1xf32>
    %50 = vector.broadcast %49 : vector<8x1xf32> to vector<8x32xf32>
    %51 = vector.broadcast %9 : vector<1x32xf32> to vector<8x32xf32>
    %52 = arith.mulf %50, %51 : vector<8x32xf32>
    %53 = vector.broadcast %3 : vector<1x32xf32> to vector<8x32xf32>
    %54 = arith.addf %52, %53 : vector<8x32xf32>
    %cst_12 = arith.constant dense<0.000000e+00> : vector<8xf32>
    %55 = vector.multi_reduction <add>, %54, %cst_12 [1] : vector<8x32xf32> to vector<8xf32>
    %56 = vector.shape_cast %55 : vector<8xf32> to vector<8x1xf32>
    %cst_13 = arith.constant 3.200000e+01 : f32
    %57 = vector.broadcast %cst_13 : f32 to vector<8x1xf32>
    %58 = arith.divf %56, %57 : vector<8x1xf32>
    %59 = vector.broadcast %58 : vector<8x1xf32> to vector<8x32xf32>
    %60 = arith.subf %54, %59 : vector<8x32xf32>
    %61 = arith.mulf %60, %60 : vector<8x32xf32>
    %cst_14 = arith.constant dense<0.000000e+00> : vector<8xf32>
    %62 = vector.multi_reduction <add>, %61, %cst_14 [1] : vector<8x32xf32> to vector<8xf32>
    %63 = vector.shape_cast %62 : vector<8xf32> to vector<8x1xf32>
    %cst_15 = arith.constant 3.200000e+01 : f32
    %64 = vector.broadcast %cst_15 : f32 to vector<8x1xf32>
    %65 = arith.divf %63, %64 : vector<8x1xf32>
    %66 = vector.broadcast %58 : vector<8x1xf32> to vector<8x32xf32>
    %67 = arith.subf %54, %66 : vector<8x32xf32>
    %cst_16 = arith.constant 9.99999974E-6 : f32
    %68 = vector.broadcast %cst_16 : f32 to vector<8x1xf32>
    %69 = arith.addf %65, %68 : vector<8x1xf32>
    %70 = math.rsqrt %69 : vector<8x1xf32>
    %71 = vector.broadcast %70 : vector<8x1xf32> to vector<8x32xf32>
    %72 = arith.mulf %67, %71 : vector<8x32xf32>
    %73 = vector.broadcast %4 : vector<1x32xf32> to vector<8x32xf32>
    %74 = arith.mulf %72, %73 : vector<8x32xf32>
    %75 = vector.broadcast %5 : vector<1x32xf32> to vector<8x32xf32>
    %76 = arith.addf %74, %75 : vector<8x32xf32>
    %cst_17 = arith.constant 0.000000e+00 : f32
    %77 = vector.broadcast %cst_17 : f32 to vector<8x32xf32>
    %78 = arith.maximumf %76, %77 : vector<8x32xf32>
    %79 = vector.extract_strided_slice %0 {offsets = [0, 16], sizes = [8, 8], strides = [1, 1]} : vector<8x64xf32> to vector<8x8xf32>
    %80 = arith.mulf %79, %1 : vector<8x8xf32>
    %cst_18 = arith.constant dense<0.000000e+00> : vector<8xf32>
    %81 = vector.multi_reduction <add>, %80, %cst_18 [1] : vector<8x8xf32> to vector<8xf32>
    %82 = vector.shape_cast %81 : vector<8xf32> to vector<8x1xf32>
    %83 = vector.broadcast %82 : vector<8x1xf32> to vector<8x32xf32>
    %84 = vector.broadcast %9 : vector<1x32xf32> to vector<8x32xf32>
    %85 = arith.mulf %83, %84 : vector<8x32xf32>
    %86 = vector.broadcast %3 : vector<1x32xf32> to vector<8x32xf32>
    %87 = arith.addf %85, %86 : vector<8x32xf32>
    %cst_19 = arith.constant dense<0.000000e+00> : vector<8xf32>
    %88 = vector.multi_reduction <add>, %87, %cst_19 [1] : vector<8x32xf32> to vector<8xf32>
    %89 = vector.shape_cast %88 : vector<8xf32> to vector<8x1xf32>
    %cst_20 = arith.constant 3.200000e+01 : f32
    %90 = vector.broadcast %cst_20 : f32 to vector<8x1xf32>
    %91 = arith.divf %89, %90 : vector<8x1xf32>
    %92 = vector.broadcast %91 : vector<8x1xf32> to vector<8x32xf32>
    %93 = arith.subf %87, %92 : vector<8x32xf32>
    %94 = arith.mulf %93, %93 : vector<8x32xf32>
    %cst_21 = arith.constant dense<0.000000e+00> : vector<8xf32>
    %95 = vector.multi_reduction <add>, %94, %cst_21 [1] : vector<8x32xf32> to vector<8xf32>
    %96 = vector.shape_cast %95 : vector<8xf32> to vector<8x1xf32>
    %cst_22 = arith.constant 3.200000e+01 : f32
    %97 = vector.broadcast %cst_22 : f32 to vector<8x1xf32>
    %98 = arith.divf %96, %97 : vector<8x1xf32>
    %99 = vector.broadcast %91 : vector<8x1xf32> to vector<8x32xf32>
    %100 = arith.subf %87, %99 : vector<8x32xf32>
    %cst_23 = arith.constant 9.99999974E-6 : f32
    %101 = vector.broadcast %cst_23 : f32 to vector<8x1xf32>
    %102 = arith.addf %98, %101 : vector<8x1xf32>
    %103 = math.rsqrt %102 : vector<8x1xf32>
    %104 = vector.broadcast %103 : vector<8x1xf32> to vector<8x32xf32>
    %105 = arith.mulf %100, %104 : vector<8x32xf32>
    %106 = vector.broadcast %4 : vector<1x32xf32> to vector<8x32xf32>
    %107 = arith.mulf %105, %106 : vector<8x32xf32>
    %108 = vector.broadcast %5 : vector<1x32xf32> to vector<8x32xf32>
    %109 = arith.addf %107, %108 : vector<8x32xf32>
    %cst_24 = arith.constant 0.000000e+00 : f32
    %110 = vector.broadcast %cst_24 : f32 to vector<8x32xf32>
    %111 = arith.maximumf %109, %110 : vector<8x32xf32>
    %112 = vector.extract_strided_slice %0 {offsets = [0, 24], sizes = [8, 8], strides = [1, 1]} : vector<8x64xf32> to vector<8x8xf32>
    %113 = arith.mulf %112, %1 : vector<8x8xf32>
    %cst_25 = arith.constant dense<0.000000e+00> : vector<8xf32>
    %114 = vector.multi_reduction <add>, %113, %cst_25 [1] : vector<8x8xf32> to vector<8xf32>
    %115 = vector.shape_cast %114 : vector<8xf32> to vector<8x1xf32>
    %116 = vector.broadcast %115 : vector<8x1xf32> to vector<8x32xf32>
    %117 = vector.broadcast %9 : vector<1x32xf32> to vector<8x32xf32>
    %118 = arith.mulf %116, %117 : vector<8x32xf32>
    %119 = vector.broadcast %3 : vector<1x32xf32> to vector<8x32xf32>
    %120 = arith.addf %118, %119 : vector<8x32xf32>
    %cst_26 = arith.constant dense<0.000000e+00> : vector<8xf32>
    %121 = vector.multi_reduction <add>, %120, %cst_26 [1] : vector<8x32xf32> to vector<8xf32>
    %122 = vector.shape_cast %121 : vector<8xf32> to vector<8x1xf32>
    %cst_27 = arith.constant 3.200000e+01 : f32
    %123 = vector.broadcast %cst_27 : f32 to vector<8x1xf32>
    %124 = arith.divf %122, %123 : vector<8x1xf32>
    %125 = vector.broadcast %124 : vector<8x1xf32> to vector<8x32xf32>
    %126 = arith.subf %120, %125 : vector<8x32xf32>
    %127 = arith.mulf %126, %126 : vector<8x32xf32>
    %cst_28 = arith.constant dense<0.000000e+00> : vector<8xf32>
    %128 = vector.multi_reduction <add>, %127, %cst_28 [1] : vector<8x32xf32> to vector<8xf32>
    %129 = vector.shape_cast %128 : vector<8xf32> to vector<8x1xf32>
    %cst_29 = arith.constant 3.200000e+01 : f32
    %130 = vector.broadcast %cst_29 : f32 to vector<8x1xf32>
    %131 = arith.divf %129, %130 : vector<8x1xf32>
    %132 = vector.broadcast %124 : vector<8x1xf32> to vector<8x32xf32>
    %133 = arith.subf %120, %132 : vector<8x32xf32>
    %cst_30 = arith.constant 9.99999974E-6 : f32
    %134 = vector.broadcast %cst_30 : f32 to vector<8x1xf32>
    %135 = arith.addf %131, %134 : vector<8x1xf32>
    %136 = math.rsqrt %135 : vector<8x1xf32>
    %137 = vector.broadcast %136 : vector<8x1xf32> to vector<8x32xf32>
    %138 = arith.mulf %133, %137 : vector<8x32xf32>
    %139 = vector.broadcast %4 : vector<1x32xf32> to vector<8x32xf32>
    %140 = arith.mulf %138, %139 : vector<8x32xf32>
    %141 = vector.broadcast %5 : vector<1x32xf32> to vector<8x32xf32>
    %142 = arith.addf %140, %141 : vector<8x32xf32>
    %cst_31 = arith.constant 0.000000e+00 : f32
    %143 = vector.broadcast %cst_31 : f32 to vector<8x32xf32>
    %144 = arith.maximumf %142, %143 : vector<8x32xf32>
    %145 = vector.extract_strided_slice %0 {offsets = [0, 32], sizes = [8, 8], strides = [1, 1]} : vector<8x64xf32> to vector<8x8xf32>
    %146 = arith.mulf %145, %1 : vector<8x8xf32>
    %cst_32 = arith.constant dense<0.000000e+00> : vector<8xf32>
    %147 = vector.multi_reduction <add>, %146, %cst_32 [1] : vector<8x8xf32> to vector<8xf32>
    %148 = vector.shape_cast %147 : vector<8xf32> to vector<8x1xf32>
    %149 = vector.broadcast %148 : vector<8x1xf32> to vector<8x32xf32>
    %150 = vector.broadcast %9 : vector<1x32xf32> to vector<8x32xf32>
    %151 = arith.mulf %149, %150 : vector<8x32xf32>
    %152 = vector.broadcast %3 : vector<1x32xf32> to vector<8x32xf32>
    %153 = arith.addf %151, %152 : vector<8x32xf32>
    %cst_33 = arith.constant dense<0.000000e+00> : vector<8xf32>
    %154 = vector.multi_reduction <add>, %153, %cst_33 [1] : vector<8x32xf32> to vector<8xf32>
    %155 = vector.shape_cast %154 : vector<8xf32> to vector<8x1xf32>
    %cst_34 = arith.constant 3.200000e+01 : f32
    %156 = vector.broadcast %cst_34 : f32 to vector<8x1xf32>
    %157 = arith.divf %155, %156 : vector<8x1xf32>
    %158 = vector.broadcast %157 : vector<8x1xf32> to vector<8x32xf32>
    %159 = arith.subf %153, %158 : vector<8x32xf32>
    %160 = arith.mulf %159, %159 : vector<8x32xf32>
    %cst_35 = arith.constant dense<0.000000e+00> : vector<8xf32>
    %161 = vector.multi_reduction <add>, %160, %cst_35 [1] : vector<8x32xf32> to vector<8xf32>
    %162 = vector.shape_cast %161 : vector<8xf32> to vector<8x1xf32>
    %cst_36 = arith.constant 3.200000e+01 : f32
    %163 = vector.broadcast %cst_36 : f32 to vector<8x1xf32>
    %164 = arith.divf %162, %163 : vector<8x1xf32>
    %165 = vector.broadcast %157 : vector<8x1xf32> to vector<8x32xf32>
    %166 = arith.subf %153, %165 : vector<8x32xf32>
    %cst_37 = arith.constant 9.99999974E-6 : f32
    %167 = vector.broadcast %cst_37 : f32 to vector<8x1xf32>
    %168 = arith.addf %164, %167 : vector<8x1xf32>
    %169 = math.rsqrt %168 : vector<8x1xf32>
    %170 = vector.broadcast %169 : vector<8x1xf32> to vector<8x32xf32>
    %171 = arith.mulf %166, %170 : vector<8x32xf32>
    %172 = vector.broadcast %4 : vector<1x32xf32> to vector<8x32xf32>
    %173 = arith.mulf %171, %172 : vector<8x32xf32>
    %174 = vector.broadcast %5 : vector<1x32xf32> to vector<8x32xf32>
    %175 = arith.addf %173, %174 : vector<8x32xf32>
    %cst_38 = arith.constant 0.000000e+00 : f32
    %176 = vector.broadcast %cst_38 : f32 to vector<8x32xf32>
    %177 = arith.maximumf %175, %176 : vector<8x32xf32>
    %178 = vector.extract_strided_slice %0 {offsets = [0, 40], sizes = [8, 8], strides = [1, 1]} : vector<8x64xf32> to vector<8x8xf32>
    %179 = arith.mulf %178, %1 : vector<8x8xf32>
    %cst_39 = arith.constant dense<0.000000e+00> : vector<8xf32>
    %180 = vector.multi_reduction <add>, %179, %cst_39 [1] : vector<8x8xf32> to vector<8xf32>
    %181 = vector.shape_cast %180 : vector<8xf32> to vector<8x1xf32>
    %182 = vector.broadcast %181 : vector<8x1xf32> to vector<8x32xf32>
    %183 = vector.broadcast %9 : vector<1x32xf32> to vector<8x32xf32>
    %184 = arith.mulf %182, %183 : vector<8x32xf32>
    %185 = vector.broadcast %3 : vector<1x32xf32> to vector<8x32xf32>
    %186 = arith.addf %184, %185 : vector<8x32xf32>
    %cst_40 = arith.constant dense<0.000000e+00> : vector<8xf32>
    %187 = vector.multi_reduction <add>, %186, %cst_40 [1] : vector<8x32xf32> to vector<8xf32>
    %188 = vector.shape_cast %187 : vector<8xf32> to vector<8x1xf32>
    %cst_41 = arith.constant 3.200000e+01 : f32
    %189 = vector.broadcast %cst_41 : f32 to vector<8x1xf32>
    %190 = arith.divf %188, %189 : vector<8x1xf32>
    %191 = vector.broadcast %190 : vector<8x1xf32> to vector<8x32xf32>
    %192 = arith.subf %186, %191 : vector<8x32xf32>
    %193 = arith.mulf %192, %192 : vector<8x32xf32>
    %cst_42 = arith.constant dense<0.000000e+00> : vector<8xf32>
    %194 = vector.multi_reduction <add>, %193, %cst_42 [1] : vector<8x32xf32> to vector<8xf32>
    %195 = vector.shape_cast %194 : vector<8xf32> to vector<8x1xf32>
    %cst_43 = arith.constant 3.200000e+01 : f32
    %196 = vector.broadcast %cst_43 : f32 to vector<8x1xf32>
    %197 = arith.divf %195, %196 : vector<8x1xf32>
    %198 = vector.broadcast %190 : vector<8x1xf32> to vector<8x32xf32>
    %199 = arith.subf %186, %198 : vector<8x32xf32>
    %cst_44 = arith.constant 9.99999974E-6 : f32
    %200 = vector.broadcast %cst_44 : f32 to vector<8x1xf32>
    %201 = arith.addf %197, %200 : vector<8x1xf32>
    %202 = math.rsqrt %201 : vector<8x1xf32>
    %203 = vector.broadcast %202 : vector<8x1xf32> to vector<8x32xf32>
    %204 = arith.mulf %199, %203 : vector<8x32xf32>
    %205 = vector.broadcast %4 : vector<1x32xf32> to vector<8x32xf32>
    %206 = arith.mulf %204, %205 : vector<8x32xf32>
    %207 = vector.broadcast %5 : vector<1x32xf32> to vector<8x32xf32>
    %208 = arith.addf %206, %207 : vector<8x32xf32>
    %cst_45 = arith.constant 0.000000e+00 : f32
    %209 = vector.broadcast %cst_45 : f32 to vector<8x32xf32>
    %210 = arith.maximumf %208, %209 : vector<8x32xf32>
    %211 = vector.extract_strided_slice %0 {offsets = [0, 48], sizes = [8, 8], strides = [1, 1]} : vector<8x64xf32> to vector<8x8xf32>
    %212 = arith.mulf %211, %1 : vector<8x8xf32>
    %cst_46 = arith.constant dense<0.000000e+00> : vector<8xf32>
    %213 = vector.multi_reduction <add>, %212, %cst_46 [1] : vector<8x8xf32> to vector<8xf32>
    %214 = vector.shape_cast %213 : vector<8xf32> to vector<8x1xf32>
    %215 = vector.broadcast %214 : vector<8x1xf32> to vector<8x32xf32>
    %216 = vector.broadcast %9 : vector<1x32xf32> to vector<8x32xf32>
    %217 = arith.mulf %215, %216 : vector<8x32xf32>
    %218 = vector.broadcast %3 : vector<1x32xf32> to vector<8x32xf32>
    %219 = arith.addf %217, %218 : vector<8x32xf32>
    %cst_47 = arith.constant dense<0.000000e+00> : vector<8xf32>
    %220 = vector.multi_reduction <add>, %219, %cst_47 [1] : vector<8x32xf32> to vector<8xf32>
    %221 = vector.shape_cast %220 : vector<8xf32> to vector<8x1xf32>
    %cst_48 = arith.constant 3.200000e+01 : f32
    %222 = vector.broadcast %cst_48 : f32 to vector<8x1xf32>
    %223 = arith.divf %221, %222 : vector<8x1xf32>
    %224 = vector.broadcast %223 : vector<8x1xf32> to vector<8x32xf32>
    %225 = arith.subf %219, %224 : vector<8x32xf32>
    %226 = arith.mulf %225, %225 : vector<8x32xf32>
    %cst_49 = arith.constant dense<0.000000e+00> : vector<8xf32>
    %227 = vector.multi_reduction <add>, %226, %cst_49 [1] : vector<8x32xf32> to vector<8xf32>
    %228 = vector.shape_cast %227 : vector<8xf32> to vector<8x1xf32>
    %cst_50 = arith.constant 3.200000e+01 : f32
    %229 = vector.broadcast %cst_50 : f32 to vector<8x1xf32>
    %230 = arith.divf %228, %229 : vector<8x1xf32>
    %231 = vector.broadcast %223 : vector<8x1xf32> to vector<8x32xf32>
    %232 = arith.subf %219, %231 : vector<8x32xf32>
    %cst_51 = arith.constant 9.99999974E-6 : f32
    %233 = vector.broadcast %cst_51 : f32 to vector<8x1xf32>
    %234 = arith.addf %230, %233 : vector<8x1xf32>
    %235 = math.rsqrt %234 : vector<8x1xf32>
    %236 = vector.broadcast %235 : vector<8x1xf32> to vector<8x32xf32>
    %237 = arith.mulf %232, %236 : vector<8x32xf32>
    %238 = vector.broadcast %4 : vector<1x32xf32> to vector<8x32xf32>
    %239 = arith.mulf %237, %238 : vector<8x32xf32>
    %240 = vector.broadcast %5 : vector<1x32xf32> to vector<8x32xf32>
    %241 = arith.addf %239, %240 : vector<8x32xf32>
    %cst_52 = arith.constant 0.000000e+00 : f32
    %242 = vector.broadcast %cst_52 : f32 to vector<8x32xf32>
    %243 = arith.maximumf %241, %242 : vector<8x32xf32>
    %244 = vector.extract_strided_slice %0 {offsets = [0, 56], sizes = [8, 8], strides = [1, 1]} : vector<8x64xf32> to vector<8x8xf32>
    %245 = arith.mulf %244, %1 : vector<8x8xf32>
    %cst_53 = arith.constant dense<0.000000e+00> : vector<8xf32>
    %246 = vector.multi_reduction <add>, %245, %cst_53 [1] : vector<8x8xf32> to vector<8xf32>
    %247 = vector.shape_cast %246 : vector<8xf32> to vector<8x1xf32>
    %248 = vector.broadcast %247 : vector<8x1xf32> to vector<8x32xf32>
    %249 = vector.broadcast %9 : vector<1x32xf32> to vector<8x32xf32>
    %250 = arith.mulf %248, %249 : vector<8x32xf32>
    %251 = vector.broadcast %3 : vector<1x32xf32> to vector<8x32xf32>
    %252 = arith.addf %250, %251 : vector<8x32xf32>
    %cst_54 = arith.constant dense<0.000000e+00> : vector<8xf32>
    %253 = vector.multi_reduction <add>, %252, %cst_54 [1] : vector<8x32xf32> to vector<8xf32>
    %254 = vector.shape_cast %253 : vector<8xf32> to vector<8x1xf32>
    %cst_55 = arith.constant 3.200000e+01 : f32
    %255 = vector.broadcast %cst_55 : f32 to vector<8x1xf32>
    %256 = arith.divf %254, %255 : vector<8x1xf32>
    %257 = vector.broadcast %256 : vector<8x1xf32> to vector<8x32xf32>
    %258 = arith.subf %252, %257 : vector<8x32xf32>
    %259 = arith.mulf %258, %258 : vector<8x32xf32>
    %cst_56 = arith.constant dense<0.000000e+00> : vector<8xf32>
    %260 = vector.multi_reduction <add>, %259, %cst_56 [1] : vector<8x32xf32> to vector<8xf32>
    %261 = vector.shape_cast %260 : vector<8xf32> to vector<8x1xf32>
    %cst_57 = arith.constant 3.200000e+01 : f32
    %262 = vector.broadcast %cst_57 : f32 to vector<8x1xf32>
    %263 = arith.divf %261, %262 : vector<8x1xf32>
    %264 = vector.broadcast %256 : vector<8x1xf32> to vector<8x32xf32>
    %265 = arith.subf %252, %264 : vector<8x32xf32>
    %cst_58 = arith.constant 9.99999974E-6 : f32
    %266 = vector.broadcast %cst_58 : f32 to vector<8x1xf32>
    %267 = arith.addf %263, %266 : vector<8x1xf32>
    %268 = math.rsqrt %267 : vector<8x1xf32>
    %269 = vector.broadcast %268 : vector<8x1xf32> to vector<8x32xf32>
    %270 = arith.mulf %265, %269 : vector<8x32xf32>
    %271 = vector.broadcast %4 : vector<1x32xf32> to vector<8x32xf32>
    %272 = arith.mulf %270, %271 : vector<8x32xf32>
    %273 = vector.broadcast %5 : vector<1x32xf32> to vector<8x32xf32>
    %274 = arith.addf %272, %273 : vector<8x32xf32>
    %cst_59 = arith.constant 0.000000e+00 : f32
    %275 = vector.broadcast %cst_59 : f32 to vector<8x32xf32>
    %276 = arith.maximumf %274, %275 : vector<8x32xf32>
    %c0_60 = arith.constant 0 : index
    %c0_61 = arith.constant 0 : index
    %277 = vector.load %arg4[%c0_60, %c0_61] : memref<32x32xf32, #tpu.memory_space<vmem>>, vector<32x32xf32>
    %cst_62 = arith.constant dense<0.000000e+00> : vector<8x32xf32>
    %278 = tpu.matmul %45, %277, %cst_62 {dimension_numbers = #tpu.dot_dimension_numbers<[1], [0], [0], [1], [0, 0, 1, 1], [], []>} : vector<8x32xf32>, vector<32x32xf32>, vector<8x32xf32> -> vector<8x32xf32>
    %cst_63 = arith.constant dense<0.000000e+00> : vector<8x32xf32>
    %279 = tpu.matmul %78, %277, %cst_63 {dimension_numbers = #tpu.dot_dimension_numbers<[1], [0], [0], [1], [0, 0, 1, 1], [], []>} : vector<8x32xf32>, vector<32x32xf32>, vector<8x32xf32> -> vector<8x32xf32>
    %cst_64 = arith.constant dense<0.000000e+00> : vector<8x32xf32>
    %280 = tpu.matmul %111, %277, %cst_64 {dimension_numbers = #tpu.dot_dimension_numbers<[1], [0], [0], [1], [0, 0, 1, 1], [], []>} : vector<8x32xf32>, vector<32x32xf32>, vector<8x32xf32> -> vector<8x32xf32>
    %cst_65 = arith.constant dense<0.000000e+00> : vector<8x32xf32>
    %281 = tpu.matmul %144, %277, %cst_65 {dimension_numbers = #tpu.dot_dimension_numbers<[1], [0], [0], [1], [0, 0, 1, 1], [], []>} : vector<8x32xf32>, vector<32x32xf32>, vector<8x32xf32> -> vector<8x32xf32>
    %cst_66 = arith.constant dense<0.000000e+00> : vector<8x32xf32>
    %282 = tpu.matmul %177, %277, %cst_66 {dimension_numbers = #tpu.dot_dimension_numbers<[1], [0], [0], [1], [0, 0, 1, 1], [], []>} : vector<8x32xf32>, vector<32x32xf32>, vector<8x32xf32> -> vector<8x32xf32>
    %cst_67 = arith.constant dense<0.000000e+00> : vector<8x32xf32>
    %283 = tpu.matmul %210, %277, %cst_67 {dimension_numbers = #tpu.dot_dimension_numbers<[1], [0], [0], [1], [0, 0, 1, 1], [], []>} : vector<8x32xf32>, vector<32x32xf32>, vector<8x32xf32> -> vector<8x32xf32>
    %cst_68 = arith.constant dense<0.000000e+00> : vector<8x32xf32>
    %284 = tpu.matmul %243, %277, %cst_68 {dimension_numbers = #tpu.dot_dimension_numbers<[1], [0], [0], [1], [0, 0, 1, 1], [], []>} : vector<8x32xf32>, vector<32x32xf32>, vector<8x32xf32> -> vector<8x32xf32>
    %cst_69 = arith.constant dense<0.000000e+00> : vector<8x32xf32>
    %285 = tpu.matmul %276, %277, %cst_69 {dimension_numbers = #tpu.dot_dimension_numbers<[1], [0], [0], [1], [0, 0, 1, 1], [], []>} : vector<8x32xf32>, vector<32x32xf32>, vector<8x32xf32> -> vector<8x32xf32>
    %286 = vector.extract_strided_slice %0 {offsets = [0, 0], sizes = [8, 8], strides = [1, 1]} : vector<8x64xf32> to vector<8x8xf32>
    %287 = vector.extract_strided_slice %286 {offsets = [0, 0], sizes = [8, 1], strides = [1, 1]} : vector<8x8xf32> to vector<8x1xf32>
    %288 = vector.broadcast %287 : vector<8x1xf32> to vector<8x32xf32>
    %289 = arith.mulf %288, %278 : vector<8x32xf32>
    %290 = vector.extract_strided_slice %286 {offsets = [0, 1], sizes = [8, 1], strides = [1, 1]} : vector<8x8xf32> to vector<8x1xf32>
    %291 = vector.broadcast %290 : vector<8x1xf32> to vector<8x32xf32>
    %292 = arith.mulf %291, %279 : vector<8x32xf32>
    %293 = arith.addf %289, %292 : vector<8x32xf32>
    %294 = vector.extract_strided_slice %286 {offsets = [0, 2], sizes = [8, 1], strides = [1, 1]} : vector<8x8xf32> to vector<8x1xf32>
    %295 = vector.broadcast %294 : vector<8x1xf32> to vector<8x32xf32>
    %296 = arith.mulf %295, %280 : vector<8x32xf32>
    %297 = arith.addf %293, %296 : vector<8x32xf32>
    %298 = vector.extract_strided_slice %286 {offsets = [0, 3], sizes = [8, 1], strides = [1, 1]} : vector<8x8xf32> to vector<8x1xf32>
    %299 = vector.broadcast %298 : vector<8x1xf32> to vector<8x32xf32>
    %300 = arith.mulf %299, %281 : vector<8x32xf32>
    %301 = arith.addf %297, %300 : vector<8x32xf32>
    %302 = vector.extract_strided_slice %286 {offsets = [0, 4], sizes = [8, 1], strides = [1, 1]} : vector<8x8xf32> to vector<8x1xf32>
    %303 = vector.broadcast %302 : vector<8x1xf32> to vector<8x32xf32>
    %304 = arith.mulf %303, %282 : vector<8x32xf32>
    %305 = arith.addf %301, %304 : vector<8x32xf32>
    %306 = vector.extract_strided_slice %286 {offsets = [0, 5], sizes = [8, 1], strides = [1, 1]} : vector<8x8xf32> to vector<8x1xf32>
    %307 = vector.broadcast %306 : vector<8x1xf32> to vector<8x32xf32>
    %308 = arith.mulf %307, %283 : vector<8x32xf32>
    %309 = arith.addf %305, %308 : vector<8x32xf32>
    %310 = vector.extract_strided_slice %286 {offsets = [0, 6], sizes = [8, 1], strides = [1, 1]} : vector<8x8xf32> to vector<8x1xf32>
    %311 = vector.broadcast %310 : vector<8x1xf32> to vector<8x32xf32>
    %312 = arith.mulf %311, %284 : vector<8x32xf32>
    %313 = arith.addf %309, %312 : vector<8x32xf32>
    %314 = vector.extract_strided_slice %286 {offsets = [0, 7], sizes = [8, 1], strides = [1, 1]} : vector<8x8xf32> to vector<8x1xf32>
    %315 = vector.broadcast %314 : vector<8x1xf32> to vector<8x32xf32>
    %316 = arith.mulf %315, %285 : vector<8x32xf32>
    %317 = arith.addf %313, %316 : vector<8x32xf32>
    %318 = vector.broadcast %6 : vector<1x32xf32> to vector<8x32xf32>
    %319 = arith.addf %317, %318 : vector<8x32xf32>
    %cst_70 = arith.constant dense<0.000000e+00> : vector<8xf32>
    %320 = vector.multi_reduction <add>, %319, %cst_70 [1] : vector<8x32xf32> to vector<8xf32>
    %321 = vector.shape_cast %320 : vector<8xf32> to vector<8x1xf32>
    %cst_71 = arith.constant 3.200000e+01 : f32
    %322 = vector.broadcast %cst_71 : f32 to vector<8x1xf32>
    %323 = arith.divf %321, %322 : vector<8x1xf32>
    %324 = vector.broadcast %323 : vector<8x1xf32> to vector<8x32xf32>
    %325 = arith.subf %319, %324 : vector<8x32xf32>
    %326 = arith.mulf %325, %325 : vector<8x32xf32>
    %cst_72 = arith.constant dense<0.000000e+00> : vector<8xf32>
    %327 = vector.multi_reduction <add>, %326, %cst_72 [1] : vector<8x32xf32> to vector<8xf32>
    %328 = vector.shape_cast %327 : vector<8xf32> to vector<8x1xf32>
    %cst_73 = arith.constant 3.200000e+01 : f32
    %329 = vector.broadcast %cst_73 : f32 to vector<8x1xf32>
    %330 = arith.divf %328, %329 : vector<8x1xf32>
    %331 = vector.broadcast %323 : vector<8x1xf32> to vector<8x32xf32>
    %332 = arith.subf %319, %331 : vector<8x32xf32>
    %cst_74 = arith.constant 9.99999974E-6 : f32
    %333 = vector.broadcast %cst_74 : f32 to vector<8x1xf32>
    %334 = arith.addf %330, %333 : vector<8x1xf32>
    %335 = math.rsqrt %334 : vector<8x1xf32>
    %336 = vector.broadcast %335 : vector<8x1xf32> to vector<8x32xf32>
    %337 = arith.mulf %332, %336 : vector<8x32xf32>
    %338 = vector.broadcast %7 : vector<1x32xf32> to vector<8x32xf32>
    %339 = arith.mulf %337, %338 : vector<8x32xf32>
    %340 = vector.broadcast %8 : vector<1x32xf32> to vector<8x32xf32>
    %341 = arith.addf %339, %340 : vector<8x32xf32>
    %cst_75 = arith.constant 0.000000e+00 : f32
    %342 = vector.broadcast %cst_75 : f32 to vector<8x32xf32>
    %343 = arith.maximumf %341, %342 : vector<8x32xf32>
    %344 = vector.extract_strided_slice %0 {offsets = [0, 8], sizes = [8, 8], strides = [1, 1]} : vector<8x64xf32> to vector<8x8xf32>
    %345 = vector.extract_strided_slice %344 {offsets = [0, 0], sizes = [8, 1], strides = [1, 1]} : vector<8x8xf32> to vector<8x1xf32>
    %346 = vector.broadcast %345 : vector<8x1xf32> to vector<8x32xf32>
    %347 = arith.mulf %346, %278 : vector<8x32xf32>
    %348 = vector.extract_strided_slice %344 {offsets = [0, 1], sizes = [8, 1], strides = [1, 1]} : vector<8x8xf32> to vector<8x1xf32>
    %349 = vector.broadcast %348 : vector<8x1xf32> to vector<8x32xf32>
    %350 = arith.mulf %349, %279 : vector<8x32xf32>
    %351 = arith.addf %347, %350 : vector<8x32xf32>
    %352 = vector.extract_strided_slice %344 {offsets = [0, 2], sizes = [8, 1], strides = [1, 1]} : vector<8x8xf32> to vector<8x1xf32>
    %353 = vector.broadcast %352 : vector<8x1xf32> to vector<8x32xf32>
    %354 = arith.mulf %353, %280 : vector<8x32xf32>
    %355 = arith.addf %351, %354 : vector<8x32xf32>
    %356 = vector.extract_strided_slice %344 {offsets = [0, 3], sizes = [8, 1], strides = [1, 1]} : vector<8x8xf32> to vector<8x1xf32>
    %357 = vector.broadcast %356 : vector<8x1xf32> to vector<8x32xf32>
    %358 = arith.mulf %357, %281 : vector<8x32xf32>
    %359 = arith.addf %355, %358 : vector<8x32xf32>
    %360 = vector.extract_strided_slice %344 {offsets = [0, 4], sizes = [8, 1], strides = [1, 1]} : vector<8x8xf32> to vector<8x1xf32>
    %361 = vector.broadcast %360 : vector<8x1xf32> to vector<8x32xf32>
    %362 = arith.mulf %361, %282 : vector<8x32xf32>
    %363 = arith.addf %359, %362 : vector<8x32xf32>
    %364 = vector.extract_strided_slice %344 {offsets = [0, 5], sizes = [8, 1], strides = [1, 1]} : vector<8x8xf32> to vector<8x1xf32>
    %365 = vector.broadcast %364 : vector<8x1xf32> to vector<8x32xf32>
    %366 = arith.mulf %365, %283 : vector<8x32xf32>
    %367 = arith.addf %363, %366 : vector<8x32xf32>
    %368 = vector.extract_strided_slice %344 {offsets = [0, 6], sizes = [8, 1], strides = [1, 1]} : vector<8x8xf32> to vector<8x1xf32>
    %369 = vector.broadcast %368 : vector<8x1xf32> to vector<8x32xf32>
    %370 = arith.mulf %369, %284 : vector<8x32xf32>
    %371 = arith.addf %367, %370 : vector<8x32xf32>
    %372 = vector.extract_strided_slice %344 {offsets = [0, 7], sizes = [8, 1], strides = [1, 1]} : vector<8x8xf32> to vector<8x1xf32>
    %373 = vector.broadcast %372 : vector<8x1xf32> to vector<8x32xf32>
    %374 = arith.mulf %373, %285 : vector<8x32xf32>
    %375 = arith.addf %371, %374 : vector<8x32xf32>
    %376 = vector.broadcast %6 : vector<1x32xf32> to vector<8x32xf32>
    %377 = arith.addf %375, %376 : vector<8x32xf32>
    %cst_76 = arith.constant dense<0.000000e+00> : vector<8xf32>
    %378 = vector.multi_reduction <add>, %377, %cst_76 [1] : vector<8x32xf32> to vector<8xf32>
    %379 = vector.shape_cast %378 : vector<8xf32> to vector<8x1xf32>
    %cst_77 = arith.constant 3.200000e+01 : f32
    %380 = vector.broadcast %cst_77 : f32 to vector<8x1xf32>
    %381 = arith.divf %379, %380 : vector<8x1xf32>
    %382 = vector.broadcast %381 : vector<8x1xf32> to vector<8x32xf32>
    %383 = arith.subf %377, %382 : vector<8x32xf32>
    %384 = arith.mulf %383, %383 : vector<8x32xf32>
    %cst_78 = arith.constant dense<0.000000e+00> : vector<8xf32>
    %385 = vector.multi_reduction <add>, %384, %cst_78 [1] : vector<8x32xf32> to vector<8xf32>
    %386 = vector.shape_cast %385 : vector<8xf32> to vector<8x1xf32>
    %cst_79 = arith.constant 3.200000e+01 : f32
    %387 = vector.broadcast %cst_79 : f32 to vector<8x1xf32>
    %388 = arith.divf %386, %387 : vector<8x1xf32>
    %389 = vector.broadcast %381 : vector<8x1xf32> to vector<8x32xf32>
    %390 = arith.subf %377, %389 : vector<8x32xf32>
    %cst_80 = arith.constant 9.99999974E-6 : f32
    %391 = vector.broadcast %cst_80 : f32 to vector<8x1xf32>
    %392 = arith.addf %388, %391 : vector<8x1xf32>
    %393 = math.rsqrt %392 : vector<8x1xf32>
    %394 = vector.broadcast %393 : vector<8x1xf32> to vector<8x32xf32>
    %395 = arith.mulf %390, %394 : vector<8x32xf32>
    %396 = vector.broadcast %7 : vector<1x32xf32> to vector<8x32xf32>
    %397 = arith.mulf %395, %396 : vector<8x32xf32>
    %398 = vector.broadcast %8 : vector<1x32xf32> to vector<8x32xf32>
    %399 = arith.addf %397, %398 : vector<8x32xf32>
    %cst_81 = arith.constant 0.000000e+00 : f32
    %400 = vector.broadcast %cst_81 : f32 to vector<8x32xf32>
    %401 = arith.maximumf %399, %400 : vector<8x32xf32>
    %402 = vector.extract_strided_slice %0 {offsets = [0, 16], sizes = [8, 8], strides = [1, 1]} : vector<8x64xf32> to vector<8x8xf32>
    %403 = vector.extract_strided_slice %402 {offsets = [0, 0], sizes = [8, 1], strides = [1, 1]} : vector<8x8xf32> to vector<8x1xf32>
    %404 = vector.broadcast %403 : vector<8x1xf32> to vector<8x32xf32>
    %405 = arith.mulf %404, %278 : vector<8x32xf32>
    %406 = vector.extract_strided_slice %402 {offsets = [0, 1], sizes = [8, 1], strides = [1, 1]} : vector<8x8xf32> to vector<8x1xf32>
    %407 = vector.broadcast %406 : vector<8x1xf32> to vector<8x32xf32>
    %408 = arith.mulf %407, %279 : vector<8x32xf32>
    %409 = arith.addf %405, %408 : vector<8x32xf32>
    %410 = vector.extract_strided_slice %402 {offsets = [0, 2], sizes = [8, 1], strides = [1, 1]} : vector<8x8xf32> to vector<8x1xf32>
    %411 = vector.broadcast %410 : vector<8x1xf32> to vector<8x32xf32>
    %412 = arith.mulf %411, %280 : vector<8x32xf32>
    %413 = arith.addf %409, %412 : vector<8x32xf32>
    %414 = vector.extract_strided_slice %402 {offsets = [0, 3], sizes = [8, 1], strides = [1, 1]} : vector<8x8xf32> to vector<8x1xf32>
    %415 = vector.broadcast %414 : vector<8x1xf32> to vector<8x32xf32>
    %416 = arith.mulf %415, %281 : vector<8x32xf32>
    %417 = arith.addf %413, %416 : vector<8x32xf32>
    %418 = vector.extract_strided_slice %402 {offsets = [0, 4], sizes = [8, 1], strides = [1, 1]} : vector<8x8xf32> to vector<8x1xf32>
    %419 = vector.broadcast %418 : vector<8x1xf32> to vector<8x32xf32>
    %420 = arith.mulf %419, %282 : vector<8x32xf32>
    %421 = arith.addf %417, %420 : vector<8x32xf32>
    %422 = vector.extract_strided_slice %402 {offsets = [0, 5], sizes = [8, 1], strides = [1, 1]} : vector<8x8xf32> to vector<8x1xf32>
    %423 = vector.broadcast %422 : vector<8x1xf32> to vector<8x32xf32>
    %424 = arith.mulf %423, %283 : vector<8x32xf32>
    %425 = arith.addf %421, %424 : vector<8x32xf32>
    %426 = vector.extract_strided_slice %402 {offsets = [0, 6], sizes = [8, 1], strides = [1, 1]} : vector<8x8xf32> to vector<8x1xf32>
    %427 = vector.broadcast %426 : vector<8x1xf32> to vector<8x32xf32>
    %428 = arith.mulf %427, %284 : vector<8x32xf32>
    %429 = arith.addf %425, %428 : vector<8x32xf32>
    %430 = vector.extract_strided_slice %402 {offsets = [0, 7], sizes = [8, 1], strides = [1, 1]} : vector<8x8xf32> to vector<8x1xf32>
    %431 = vector.broadcast %430 : vector<8x1xf32> to vector<8x32xf32>
    %432 = arith.mulf %431, %285 : vector<8x32xf32>
    %433 = arith.addf %429, %432 : vector<8x32xf32>
    %434 = vector.broadcast %6 : vector<1x32xf32> to vector<8x32xf32>
    %435 = arith.addf %433, %434 : vector<8x32xf32>
    %cst_82 = arith.constant dense<0.000000e+00> : vector<8xf32>
    %436 = vector.multi_reduction <add>, %435, %cst_82 [1] : vector<8x32xf32> to vector<8xf32>
    %437 = vector.shape_cast %436 : vector<8xf32> to vector<8x1xf32>
    %cst_83 = arith.constant 3.200000e+01 : f32
    %438 = vector.broadcast %cst_83 : f32 to vector<8x1xf32>
    %439 = arith.divf %437, %438 : vector<8x1xf32>
    %440 = vector.broadcast %439 : vector<8x1xf32> to vector<8x32xf32>
    %441 = arith.subf %435, %440 : vector<8x32xf32>
    %442 = arith.mulf %441, %441 : vector<8x32xf32>
    %cst_84 = arith.constant dense<0.000000e+00> : vector<8xf32>
    %443 = vector.multi_reduction <add>, %442, %cst_84 [1] : vector<8x32xf32> to vector<8xf32>
    %444 = vector.shape_cast %443 : vector<8xf32> to vector<8x1xf32>
    %cst_85 = arith.constant 3.200000e+01 : f32
    %445 = vector.broadcast %cst_85 : f32 to vector<8x1xf32>
    %446 = arith.divf %444, %445 : vector<8x1xf32>
    %447 = vector.broadcast %439 : vector<8x1xf32> to vector<8x32xf32>
    %448 = arith.subf %435, %447 : vector<8x32xf32>
    %cst_86 = arith.constant 9.99999974E-6 : f32
    %449 = vector.broadcast %cst_86 : f32 to vector<8x1xf32>
    %450 = arith.addf %446, %449 : vector<8x1xf32>
    %451 = math.rsqrt %450 : vector<8x1xf32>
    %452 = vector.broadcast %451 : vector<8x1xf32> to vector<8x32xf32>
    %453 = arith.mulf %448, %452 : vector<8x32xf32>
    %454 = vector.broadcast %7 : vector<1x32xf32> to vector<8x32xf32>
    %455 = arith.mulf %453, %454 : vector<8x32xf32>
    %456 = vector.broadcast %8 : vector<1x32xf32> to vector<8x32xf32>
    %457 = arith.addf %455, %456 : vector<8x32xf32>
    %cst_87 = arith.constant 0.000000e+00 : f32
    %458 = vector.broadcast %cst_87 : f32 to vector<8x32xf32>
    %459 = arith.maximumf %457, %458 : vector<8x32xf32>
    %460 = vector.extract_strided_slice %0 {offsets = [0, 24], sizes = [8, 8], strides = [1, 1]} : vector<8x64xf32> to vector<8x8xf32>
    %461 = vector.extract_strided_slice %460 {offsets = [0, 0], sizes = [8, 1], strides = [1, 1]} : vector<8x8xf32> to vector<8x1xf32>
    %462 = vector.broadcast %461 : vector<8x1xf32> to vector<8x32xf32>
    %463 = arith.mulf %462, %278 : vector<8x32xf32>
    %464 = vector.extract_strided_slice %460 {offsets = [0, 1], sizes = [8, 1], strides = [1, 1]} : vector<8x8xf32> to vector<8x1xf32>
    %465 = vector.broadcast %464 : vector<8x1xf32> to vector<8x32xf32>
    %466 = arith.mulf %465, %279 : vector<8x32xf32>
    %467 = arith.addf %463, %466 : vector<8x32xf32>
    %468 = vector.extract_strided_slice %460 {offsets = [0, 2], sizes = [8, 1], strides = [1, 1]} : vector<8x8xf32> to vector<8x1xf32>
    %469 = vector.broadcast %468 : vector<8x1xf32> to vector<8x32xf32>
    %470 = arith.mulf %469, %280 : vector<8x32xf32>
    %471 = arith.addf %467, %470 : vector<8x32xf32>
    %472 = vector.extract_strided_slice %460 {offsets = [0, 3], sizes = [8, 1], strides = [1, 1]} : vector<8x8xf32> to vector<8x1xf32>
    %473 = vector.broadcast %472 : vector<8x1xf32> to vector<8x32xf32>
    %474 = arith.mulf %473, %281 : vector<8x32xf32>
    %475 = arith.addf %471, %474 : vector<8x32xf32>
    %476 = vector.extract_strided_slice %460 {offsets = [0, 4], sizes = [8, 1], strides = [1, 1]} : vector<8x8xf32> to vector<8x1xf32>
    %477 = vector.broadcast %476 : vector<8x1xf32> to vector<8x32xf32>
    %478 = arith.mulf %477, %282 : vector<8x32xf32>
    %479 = arith.addf %475, %478 : vector<8x32xf32>
    %480 = vector.extract_strided_slice %460 {offsets = [0, 5], sizes = [8, 1], strides = [1, 1]} : vector<8x8xf32> to vector<8x1xf32>
    %481 = vector.broadcast %480 : vector<8x1xf32> to vector<8x32xf32>
    %482 = arith.mulf %481, %283 : vector<8x32xf32>
    %483 = arith.addf %479, %482 : vector<8x32xf32>
    %484 = vector.extract_strided_slice %460 {offsets = [0, 6], sizes = [8, 1], strides = [1, 1]} : vector<8x8xf32> to vector<8x1xf32>
    %485 = vector.broadcast %484 : vector<8x1xf32> to vector<8x32xf32>
    %486 = arith.mulf %485, %284 : vector<8x32xf32>
    %487 = arith.addf %483, %486 : vector<8x32xf32>
    %488 = vector.extract_strided_slice %460 {offsets = [0, 7], sizes = [8, 1], strides = [1, 1]} : vector<8x8xf32> to vector<8x1xf32>
    %489 = vector.broadcast %488 : vector<8x1xf32> to vector<8x32xf32>
    %490 = arith.mulf %489, %285 : vector<8x32xf32>
    %491 = arith.addf %487, %490 : vector<8x32xf32>
    %492 = vector.broadcast %6 : vector<1x32xf32> to vector<8x32xf32>
    %493 = arith.addf %491, %492 : vector<8x32xf32>
    %cst_88 = arith.constant dense<0.000000e+00> : vector<8xf32>
    %494 = vector.multi_reduction <add>, %493, %cst_88 [1] : vector<8x32xf32> to vector<8xf32>
    %495 = vector.shape_cast %494 : vector<8xf32> to vector<8x1xf32>
    %cst_89 = arith.constant 3.200000e+01 : f32
    %496 = vector.broadcast %cst_89 : f32 to vector<8x1xf32>
    %497 = arith.divf %495, %496 : vector<8x1xf32>
    %498 = vector.broadcast %497 : vector<8x1xf32> to vector<8x32xf32>
    %499 = arith.subf %493, %498 : vector<8x32xf32>
    %500 = arith.mulf %499, %499 : vector<8x32xf32>
    %cst_90 = arith.constant dense<0.000000e+00> : vector<8xf32>
    %501 = vector.multi_reduction <add>, %500, %cst_90 [1] : vector<8x32xf32> to vector<8xf32>
    %502 = vector.shape_cast %501 : vector<8xf32> to vector<8x1xf32>
    %cst_91 = arith.constant 3.200000e+01 : f32
    %503 = vector.broadcast %cst_91 : f32 to vector<8x1xf32>
    %504 = arith.divf %502, %503 : vector<8x1xf32>
    %505 = vector.broadcast %497 : vector<8x1xf32> to vector<8x32xf32>
    %506 = arith.subf %493, %505 : vector<8x32xf32>
    %cst_92 = arith.constant 9.99999974E-6 : f32
    %507 = vector.broadcast %cst_92 : f32 to vector<8x1xf32>
    %508 = arith.addf %504, %507 : vector<8x1xf32>
    %509 = math.rsqrt %508 : vector<8x1xf32>
    %510 = vector.broadcast %509 : vector<8x1xf32> to vector<8x32xf32>
    %511 = arith.mulf %506, %510 : vector<8x32xf32>
    %512 = vector.broadcast %7 : vector<1x32xf32> to vector<8x32xf32>
    %513 = arith.mulf %511, %512 : vector<8x32xf32>
    %514 = vector.broadcast %8 : vector<1x32xf32> to vector<8x32xf32>
    %515 = arith.addf %513, %514 : vector<8x32xf32>
    %cst_93 = arith.constant 0.000000e+00 : f32
    %516 = vector.broadcast %cst_93 : f32 to vector<8x32xf32>
    %517 = arith.maximumf %515, %516 : vector<8x32xf32>
    %518 = vector.extract_strided_slice %0 {offsets = [0, 32], sizes = [8, 8], strides = [1, 1]} : vector<8x64xf32> to vector<8x8xf32>
    %519 = vector.extract_strided_slice %518 {offsets = [0, 0], sizes = [8, 1], strides = [1, 1]} : vector<8x8xf32> to vector<8x1xf32>
    %520 = vector.broadcast %519 : vector<8x1xf32> to vector<8x32xf32>
    %521 = arith.mulf %520, %278 : vector<8x32xf32>
    %522 = vector.extract_strided_slice %518 {offsets = [0, 1], sizes = [8, 1], strides = [1, 1]} : vector<8x8xf32> to vector<8x1xf32>
    %523 = vector.broadcast %522 : vector<8x1xf32> to vector<8x32xf32>
    %524 = arith.mulf %523, %279 : vector<8x32xf32>
    %525 = arith.addf %521, %524 : vector<8x32xf32>
    %526 = vector.extract_strided_slice %518 {offsets = [0, 2], sizes = [8, 1], strides = [1, 1]} : vector<8x8xf32> to vector<8x1xf32>
    %527 = vector.broadcast %526 : vector<8x1xf32> to vector<8x32xf32>
    %528 = arith.mulf %527, %280 : vector<8x32xf32>
    %529 = arith.addf %525, %528 : vector<8x32xf32>
    %530 = vector.extract_strided_slice %518 {offsets = [0, 3], sizes = [8, 1], strides = [1, 1]} : vector<8x8xf32> to vector<8x1xf32>
    %531 = vector.broadcast %530 : vector<8x1xf32> to vector<8x32xf32>
    %532 = arith.mulf %531, %281 : vector<8x32xf32>
    %533 = arith.addf %529, %532 : vector<8x32xf32>
    %534 = vector.extract_strided_slice %518 {offsets = [0, 4], sizes = [8, 1], strides = [1, 1]} : vector<8x8xf32> to vector<8x1xf32>
    %535 = vector.broadcast %534 : vector<8x1xf32> to vector<8x32xf32>
    %536 = arith.mulf %535, %282 : vector<8x32xf32>
    %537 = arith.addf %533, %536 : vector<8x32xf32>
    %538 = vector.extract_strided_slice %518 {offsets = [0, 5], sizes = [8, 1], strides = [1, 1]} : vector<8x8xf32> to vector<8x1xf32>
    %539 = vector.broadcast %538 : vector<8x1xf32> to vector<8x32xf32>
    %540 = arith.mulf %539, %283 : vector<8x32xf32>
    %541 = arith.addf %537, %540 : vector<8x32xf32>
    %542 = vector.extract_strided_slice %518 {offsets = [0, 6], sizes = [8, 1], strides = [1, 1]} : vector<8x8xf32> to vector<8x1xf32>
    %543 = vector.broadcast %542 : vector<8x1xf32> to vector<8x32xf32>
    %544 = arith.mulf %543, %284 : vector<8x32xf32>
    %545 = arith.addf %541, %544 : vector<8x32xf32>
    %546 = vector.extract_strided_slice %518 {offsets = [0, 7], sizes = [8, 1], strides = [1, 1]} : vector<8x8xf32> to vector<8x1xf32>
    %547 = vector.broadcast %546 : vector<8x1xf32> to vector<8x32xf32>
    %548 = arith.mulf %547, %285 : vector<8x32xf32>
    %549 = arith.addf %545, %548 : vector<8x32xf32>
    %550 = vector.broadcast %6 : vector<1x32xf32> to vector<8x32xf32>
    %551 = arith.addf %549, %550 : vector<8x32xf32>
    %cst_94 = arith.constant dense<0.000000e+00> : vector<8xf32>
    %552 = vector.multi_reduction <add>, %551, %cst_94 [1] : vector<8x32xf32> to vector<8xf32>
    %553 = vector.shape_cast %552 : vector<8xf32> to vector<8x1xf32>
    %cst_95 = arith.constant 3.200000e+01 : f32
    %554 = vector.broadcast %cst_95 : f32 to vector<8x1xf32>
    %555 = arith.divf %553, %554 : vector<8x1xf32>
    %556 = vector.broadcast %555 : vector<8x1xf32> to vector<8x32xf32>
    %557 = arith.subf %551, %556 : vector<8x32xf32>
    %558 = arith.mulf %557, %557 : vector<8x32xf32>
    %cst_96 = arith.constant dense<0.000000e+00> : vector<8xf32>
    %559 = vector.multi_reduction <add>, %558, %cst_96 [1] : vector<8x32xf32> to vector<8xf32>
    %560 = vector.shape_cast %559 : vector<8xf32> to vector<8x1xf32>
    %cst_97 = arith.constant 3.200000e+01 : f32
    %561 = vector.broadcast %cst_97 : f32 to vector<8x1xf32>
    %562 = arith.divf %560, %561 : vector<8x1xf32>
    %563 = vector.broadcast %555 : vector<8x1xf32> to vector<8x32xf32>
    %564 = arith.subf %551, %563 : vector<8x32xf32>
    %cst_98 = arith.constant 9.99999974E-6 : f32
    %565 = vector.broadcast %cst_98 : f32 to vector<8x1xf32>
    %566 = arith.addf %562, %565 : vector<8x1xf32>
    %567 = math.rsqrt %566 : vector<8x1xf32>
    %568 = vector.broadcast %567 : vector<8x1xf32> to vector<8x32xf32>
    %569 = arith.mulf %564, %568 : vector<8x32xf32>
    %570 = vector.broadcast %7 : vector<1x32xf32> to vector<8x32xf32>
    %571 = arith.mulf %569, %570 : vector<8x32xf32>
    %572 = vector.broadcast %8 : vector<1x32xf32> to vector<8x32xf32>
    %573 = arith.addf %571, %572 : vector<8x32xf32>
    %cst_99 = arith.constant 0.000000e+00 : f32
    %574 = vector.broadcast %cst_99 : f32 to vector<8x32xf32>
    %575 = arith.maximumf %573, %574 : vector<8x32xf32>
    %576 = vector.extract_strided_slice %0 {offsets = [0, 40], sizes = [8, 8], strides = [1, 1]} : vector<8x64xf32> to vector<8x8xf32>
    %577 = vector.extract_strided_slice %576 {offsets = [0, 0], sizes = [8, 1], strides = [1, 1]} : vector<8x8xf32> to vector<8x1xf32>
    %578 = vector.broadcast %577 : vector<8x1xf32> to vector<8x32xf32>
    %579 = arith.mulf %578, %278 : vector<8x32xf32>
    %580 = vector.extract_strided_slice %576 {offsets = [0, 1], sizes = [8, 1], strides = [1, 1]} : vector<8x8xf32> to vector<8x1xf32>
    %581 = vector.broadcast %580 : vector<8x1xf32> to vector<8x32xf32>
    %582 = arith.mulf %581, %279 : vector<8x32xf32>
    %583 = arith.addf %579, %582 : vector<8x32xf32>
    %584 = vector.extract_strided_slice %576 {offsets = [0, 2], sizes = [8, 1], strides = [1, 1]} : vector<8x8xf32> to vector<8x1xf32>
    %585 = vector.broadcast %584 : vector<8x1xf32> to vector<8x32xf32>
    %586 = arith.mulf %585, %280 : vector<8x32xf32>
    %587 = arith.addf %583, %586 : vector<8x32xf32>
    %588 = vector.extract_strided_slice %576 {offsets = [0, 3], sizes = [8, 1], strides = [1, 1]} : vector<8x8xf32> to vector<8x1xf32>
    %589 = vector.broadcast %588 : vector<8x1xf32> to vector<8x32xf32>
    %590 = arith.mulf %589, %281 : vector<8x32xf32>
    %591 = arith.addf %587, %590 : vector<8x32xf32>
    %592 = vector.extract_strided_slice %576 {offsets = [0, 4], sizes = [8, 1], strides = [1, 1]} : vector<8x8xf32> to vector<8x1xf32>
    %593 = vector.broadcast %592 : vector<8x1xf32> to vector<8x32xf32>
    %594 = arith.mulf %593, %282 : vector<8x32xf32>
    %595 = arith.addf %591, %594 : vector<8x32xf32>
    %596 = vector.extract_strided_slice %576 {offsets = [0, 5], sizes = [8, 1], strides = [1, 1]} : vector<8x8xf32> to vector<8x1xf32>
    %597 = vector.broadcast %596 : vector<8x1xf32> to vector<8x32xf32>
    %598 = arith.mulf %597, %283 : vector<8x32xf32>
    %599 = arith.addf %595, %598 : vector<8x32xf32>
    %600 = vector.extract_strided_slice %576 {offsets = [0, 6], sizes = [8, 1], strides = [1, 1]} : vector<8x8xf32> to vector<8x1xf32>
    %601 = vector.broadcast %600 : vector<8x1xf32> to vector<8x32xf32>
    %602 = arith.mulf %601, %284 : vector<8x32xf32>
    %603 = arith.addf %599, %602 : vector<8x32xf32>
    %604 = vector.extract_strided_slice %576 {offsets = [0, 7], sizes = [8, 1], strides = [1, 1]} : vector<8x8xf32> to vector<8x1xf32>
    %605 = vector.broadcast %604 : vector<8x1xf32> to vector<8x32xf32>
    %606 = arith.mulf %605, %285 : vector<8x32xf32>
    %607 = arith.addf %603, %606 : vector<8x32xf32>
    %608 = vector.broadcast %6 : vector<1x32xf32> to vector<8x32xf32>
    %609 = arith.addf %607, %608 : vector<8x32xf32>
    %cst_100 = arith.constant dense<0.000000e+00> : vector<8xf32>
    %610 = vector.multi_reduction <add>, %609, %cst_100 [1] : vector<8x32xf32> to vector<8xf32>
    %611 = vector.shape_cast %610 : vector<8xf32> to vector<8x1xf32>
    %cst_101 = arith.constant 3.200000e+01 : f32
    %612 = vector.broadcast %cst_101 : f32 to vector<8x1xf32>
    %613 = arith.divf %611, %612 : vector<8x1xf32>
    %614 = vector.broadcast %613 : vector<8x1xf32> to vector<8x32xf32>
    %615 = arith.subf %609, %614 : vector<8x32xf32>
    %616 = arith.mulf %615, %615 : vector<8x32xf32>
    %cst_102 = arith.constant dense<0.000000e+00> : vector<8xf32>
    %617 = vector.multi_reduction <add>, %616, %cst_102 [1] : vector<8x32xf32> to vector<8xf32>
    %618 = vector.shape_cast %617 : vector<8xf32> to vector<8x1xf32>
    %cst_103 = arith.constant 3.200000e+01 : f32
    %619 = vector.broadcast %cst_103 : f32 to vector<8x1xf32>
    %620 = arith.divf %618, %619 : vector<8x1xf32>
    %621 = vector.broadcast %613 : vector<8x1xf32> to vector<8x32xf32>
    %622 = arith.subf %609, %621 : vector<8x32xf32>
    %cst_104 = arith.constant 9.99999974E-6 : f32
    %623 = vector.broadcast %cst_104 : f32 to vector<8x1xf32>
    %624 = arith.addf %620, %623 : vector<8x1xf32>
    %625 = math.rsqrt %624 : vector<8x1xf32>
    %626 = vector.broadcast %625 : vector<8x1xf32> to vector<8x32xf32>
    %627 = arith.mulf %622, %626 : vector<8x32xf32>
    %628 = vector.broadcast %7 : vector<1x32xf32> to vector<8x32xf32>
    %629 = arith.mulf %627, %628 : vector<8x32xf32>
    %630 = vector.broadcast %8 : vector<1x32xf32> to vector<8x32xf32>
    %631 = arith.addf %629, %630 : vector<8x32xf32>
    %cst_105 = arith.constant 0.000000e+00 : f32
    %632 = vector.broadcast %cst_105 : f32 to vector<8x32xf32>
    %633 = arith.maximumf %631, %632 : vector<8x32xf32>
    %634 = vector.extract_strided_slice %0 {offsets = [0, 48], sizes = [8, 8], strides = [1, 1]} : vector<8x64xf32> to vector<8x8xf32>
    %635 = vector.extract_strided_slice %634 {offsets = [0, 0], sizes = [8, 1], strides = [1, 1]} : vector<8x8xf32> to vector<8x1xf32>
    %636 = vector.broadcast %635 : vector<8x1xf32> to vector<8x32xf32>
    %637 = arith.mulf %636, %278 : vector<8x32xf32>
    %638 = vector.extract_strided_slice %634 {offsets = [0, 1], sizes = [8, 1], strides = [1, 1]} : vector<8x8xf32> to vector<8x1xf32>
    %639 = vector.broadcast %638 : vector<8x1xf32> to vector<8x32xf32>
    %640 = arith.mulf %639, %279 : vector<8x32xf32>
    %641 = arith.addf %637, %640 : vector<8x32xf32>
    %642 = vector.extract_strided_slice %634 {offsets = [0, 2], sizes = [8, 1], strides = [1, 1]} : vector<8x8xf32> to vector<8x1xf32>
    %643 = vector.broadcast %642 : vector<8x1xf32> to vector<8x32xf32>
    %644 = arith.mulf %643, %280 : vector<8x32xf32>
    %645 = arith.addf %641, %644 : vector<8x32xf32>
    %646 = vector.extract_strided_slice %634 {offsets = [0, 3], sizes = [8, 1], strides = [1, 1]} : vector<8x8xf32> to vector<8x1xf32>
    %647 = vector.broadcast %646 : vector<8x1xf32> to vector<8x32xf32>
    %648 = arith.mulf %647, %281 : vector<8x32xf32>
    %649 = arith.addf %645, %648 : vector<8x32xf32>
    %650 = vector.extract_strided_slice %634 {offsets = [0, 4], sizes = [8, 1], strides = [1, 1]} : vector<8x8xf32> to vector<8x1xf32>
    %651 = vector.broadcast %650 : vector<8x1xf32> to vector<8x32xf32>
    %652 = arith.mulf %651, %282 : vector<8x32xf32>
    %653 = arith.addf %649, %652 : vector<8x32xf32>
    %654 = vector.extract_strided_slice %634 {offsets = [0, 5], sizes = [8, 1], strides = [1, 1]} : vector<8x8xf32> to vector<8x1xf32>
    %655 = vector.broadcast %654 : vector<8x1xf32> to vector<8x32xf32>
    %656 = arith.mulf %655, %283 : vector<8x32xf32>
    %657 = arith.addf %653, %656 : vector<8x32xf32>
    %658 = vector.extract_strided_slice %634 {offsets = [0, 6], sizes = [8, 1], strides = [1, 1]} : vector<8x8xf32> to vector<8x1xf32>
    %659 = vector.broadcast %658 : vector<8x1xf32> to vector<8x32xf32>
    %660 = arith.mulf %659, %284 : vector<8x32xf32>
    %661 = arith.addf %657, %660 : vector<8x32xf32>
    %662 = vector.extract_strided_slice %634 {offsets = [0, 7], sizes = [8, 1], strides = [1, 1]} : vector<8x8xf32> to vector<8x1xf32>
    %663 = vector.broadcast %662 : vector<8x1xf32> to vector<8x32xf32>
    %664 = arith.mulf %663, %285 : vector<8x32xf32>
    %665 = arith.addf %661, %664 : vector<8x32xf32>
    %666 = vector.broadcast %6 : vector<1x32xf32> to vector<8x32xf32>
    %667 = arith.addf %665, %666 : vector<8x32xf32>
    %cst_106 = arith.constant dense<0.000000e+00> : vector<8xf32>
    %668 = vector.multi_reduction <add>, %667, %cst_106 [1] : vector<8x32xf32> to vector<8xf32>
    %669 = vector.shape_cast %668 : vector<8xf32> to vector<8x1xf32>
    %cst_107 = arith.constant 3.200000e+01 : f32
    %670 = vector.broadcast %cst_107 : f32 to vector<8x1xf32>
    %671 = arith.divf %669, %670 : vector<8x1xf32>
    %672 = vector.broadcast %671 : vector<8x1xf32> to vector<8x32xf32>
    %673 = arith.subf %667, %672 : vector<8x32xf32>
    %674 = arith.mulf %673, %673 : vector<8x32xf32>
    %cst_108 = arith.constant dense<0.000000e+00> : vector<8xf32>
    %675 = vector.multi_reduction <add>, %674, %cst_108 [1] : vector<8x32xf32> to vector<8xf32>
    %676 = vector.shape_cast %675 : vector<8xf32> to vector<8x1xf32>
    %cst_109 = arith.constant 3.200000e+01 : f32
    %677 = vector.broadcast %cst_109 : f32 to vector<8x1xf32>
    %678 = arith.divf %676, %677 : vector<8x1xf32>
    %679 = vector.broadcast %671 : vector<8x1xf32> to vector<8x32xf32>
    %680 = arith.subf %667, %679 : vector<8x32xf32>
    %cst_110 = arith.constant 9.99999974E-6 : f32
    %681 = vector.broadcast %cst_110 : f32 to vector<8x1xf32>
    %682 = arith.addf %678, %681 : vector<8x1xf32>
    %683 = math.rsqrt %682 : vector<8x1xf32>
    %684 = vector.broadcast %683 : vector<8x1xf32> to vector<8x32xf32>
    %685 = arith.mulf %680, %684 : vector<8x32xf32>
    %686 = vector.broadcast %7 : vector<1x32xf32> to vector<8x32xf32>
    %687 = arith.mulf %685, %686 : vector<8x32xf32>
    %688 = vector.broadcast %8 : vector<1x32xf32> to vector<8x32xf32>
    %689 = arith.addf %687, %688 : vector<8x32xf32>
    %cst_111 = arith.constant 0.000000e+00 : f32
    %690 = vector.broadcast %cst_111 : f32 to vector<8x32xf32>
    %691 = arith.maximumf %689, %690 : vector<8x32xf32>
    %692 = vector.extract_strided_slice %0 {offsets = [0, 56], sizes = [8, 8], strides = [1, 1]} : vector<8x64xf32> to vector<8x8xf32>
    %693 = vector.extract_strided_slice %692 {offsets = [0, 0], sizes = [8, 1], strides = [1, 1]} : vector<8x8xf32> to vector<8x1xf32>
    %694 = vector.broadcast %693 : vector<8x1xf32> to vector<8x32xf32>
    %695 = arith.mulf %694, %278 : vector<8x32xf32>
    %696 = vector.extract_strided_slice %692 {offsets = [0, 1], sizes = [8, 1], strides = [1, 1]} : vector<8x8xf32> to vector<8x1xf32>
    %697 = vector.broadcast %696 : vector<8x1xf32> to vector<8x32xf32>
    %698 = arith.mulf %697, %279 : vector<8x32xf32>
    %699 = arith.addf %695, %698 : vector<8x32xf32>
    %700 = vector.extract_strided_slice %692 {offsets = [0, 2], sizes = [8, 1], strides = [1, 1]} : vector<8x8xf32> to vector<8x1xf32>
    %701 = vector.broadcast %700 : vector<8x1xf32> to vector<8x32xf32>
    %702 = arith.mulf %701, %280 : vector<8x32xf32>
    %703 = arith.addf %699, %702 : vector<8x32xf32>
    %704 = vector.extract_strided_slice %692 {offsets = [0, 3], sizes = [8, 1], strides = [1, 1]} : vector<8x8xf32> to vector<8x1xf32>
    %705 = vector.broadcast %704 : vector<8x1xf32> to vector<8x32xf32>
    %706 = arith.mulf %705, %281 : vector<8x32xf32>
    %707 = arith.addf %703, %706 : vector<8x32xf32>
    %708 = vector.extract_strided_slice %692 {offsets = [0, 4], sizes = [8, 1], strides = [1, 1]} : vector<8x8xf32> to vector<8x1xf32>
    %709 = vector.broadcast %708 : vector<8x1xf32> to vector<8x32xf32>
    %710 = arith.mulf %709, %282 : vector<8x32xf32>
    %711 = arith.addf %707, %710 : vector<8x32xf32>
    %712 = vector.extract_strided_slice %692 {offsets = [0, 5], sizes = [8, 1], strides = [1, 1]} : vector<8x8xf32> to vector<8x1xf32>
    %713 = vector.broadcast %712 : vector<8x1xf32> to vector<8x32xf32>
    %714 = arith.mulf %713, %283 : vector<8x32xf32>
    %715 = arith.addf %711, %714 : vector<8x32xf32>
    %716 = vector.extract_strided_slice %692 {offsets = [0, 6], sizes = [8, 1], strides = [1, 1]} : vector<8x8xf32> to vector<8x1xf32>
    %717 = vector.broadcast %716 : vector<8x1xf32> to vector<8x32xf32>
    %718 = arith.mulf %717, %284 : vector<8x32xf32>
    %719 = arith.addf %715, %718 : vector<8x32xf32>
    %720 = vector.extract_strided_slice %692 {offsets = [0, 7], sizes = [8, 1], strides = [1, 1]} : vector<8x8xf32> to vector<8x1xf32>
    %721 = vector.broadcast %720 : vector<8x1xf32> to vector<8x32xf32>
    %722 = arith.mulf %721, %285 : vector<8x32xf32>
    %723 = arith.addf %719, %722 : vector<8x32xf32>
    %724 = vector.broadcast %6 : vector<1x32xf32> to vector<8x32xf32>
    %725 = arith.addf %723, %724 : vector<8x32xf32>
    %cst_112 = arith.constant dense<0.000000e+00> : vector<8xf32>
    %726 = vector.multi_reduction <add>, %725, %cst_112 [1] : vector<8x32xf32> to vector<8xf32>
    %727 = vector.shape_cast %726 : vector<8xf32> to vector<8x1xf32>
    %cst_113 = arith.constant 3.200000e+01 : f32
    %728 = vector.broadcast %cst_113 : f32 to vector<8x1xf32>
    %729 = arith.divf %727, %728 : vector<8x1xf32>
    %730 = vector.broadcast %729 : vector<8x1xf32> to vector<8x32xf32>
    %731 = arith.subf %725, %730 : vector<8x32xf32>
    %732 = arith.mulf %731, %731 : vector<8x32xf32>
    %cst_114 = arith.constant dense<0.000000e+00> : vector<8xf32>
    %733 = vector.multi_reduction <add>, %732, %cst_114 [1] : vector<8x32xf32> to vector<8xf32>
    %734 = vector.shape_cast %733 : vector<8xf32> to vector<8x1xf32>
    %cst_115 = arith.constant 3.200000e+01 : f32
    %735 = vector.broadcast %cst_115 : f32 to vector<8x1xf32>
    %736 = arith.divf %734, %735 : vector<8x1xf32>
    %737 = vector.broadcast %729 : vector<8x1xf32> to vector<8x32xf32>
    %738 = arith.subf %725, %737 : vector<8x32xf32>
    %cst_116 = arith.constant 9.99999974E-6 : f32
    %739 = vector.broadcast %cst_116 : f32 to vector<8x1xf32>
    %740 = arith.addf %736, %739 : vector<8x1xf32>
    %741 = math.rsqrt %740 : vector<8x1xf32>
    %742 = vector.broadcast %741 : vector<8x1xf32> to vector<8x32xf32>
    %743 = arith.mulf %738, %742 : vector<8x32xf32>
    %744 = vector.broadcast %7 : vector<1x32xf32> to vector<8x32xf32>
    %745 = arith.mulf %743, %744 : vector<8x32xf32>
    %746 = vector.broadcast %8 : vector<1x32xf32> to vector<8x32xf32>
    %747 = arith.addf %745, %746 : vector<8x32xf32>
    %cst_117 = arith.constant 0.000000e+00 : f32
    %748 = vector.broadcast %cst_117 : f32 to vector<8x32xf32>
    %749 = arith.maximumf %747, %748 : vector<8x32xf32>
    %c0_118 = arith.constant 0 : index
    %c0_119 = arith.constant 0 : index
    %c0_120 = arith.constant 0 : index
    %750 = vector.load %arg5[%c0_118, %c0_119, %c0_120] : memref<8x32x32xf32, #tpu.memory_space<vmem>>, vector<1x32x32xf32>
    %751 = vector.shape_cast %750 : vector<1x32x32xf32> to vector<32x32xf32>
    %cst_121 = arith.constant dense<0.000000e+00> : vector<8x32xf32>
    %752 = tpu.matmul %343, %751, %cst_121 {dimension_numbers = #tpu.dot_dimension_numbers<[1], [0], [0], [1], [0, 0, 1, 1], [], []>} : vector<8x32xf32>, vector<32x32xf32>, vector<8x32xf32> -> vector<8x32xf32>
    %c1 = arith.constant 1 : index
    %c0_122 = arith.constant 0 : index
    %c0_123 = arith.constant 0 : index
    %753 = vector.load %arg5[%c1, %c0_122, %c0_123] : memref<8x32x32xf32, #tpu.memory_space<vmem>>, vector<1x32x32xf32>
    %754 = vector.shape_cast %753 : vector<1x32x32xf32> to vector<32x32xf32>
    %cst_124 = arith.constant dense<0.000000e+00> : vector<8x32xf32>
    %755 = tpu.matmul %401, %754, %cst_124 {dimension_numbers = #tpu.dot_dimension_numbers<[1], [0], [0], [1], [0, 0, 1, 1], [], []>} : vector<8x32xf32>, vector<32x32xf32>, vector<8x32xf32> -> vector<8x32xf32>
    %756 = arith.addf %752, %755 : vector<8x32xf32>
    %c2 = arith.constant 2 : index
    %c0_125 = arith.constant 0 : index
    %c0_126 = arith.constant 0 : index
    %757 = vector.load %arg5[%c2, %c0_125, %c0_126] : memref<8x32x32xf32, #tpu.memory_space<vmem>>, vector<1x32x32xf32>
    %758 = vector.shape_cast %757 : vector<1x32x32xf32> to vector<32x32xf32>
    %cst_127 = arith.constant dense<0.000000e+00> : vector<8x32xf32>
    %759 = tpu.matmul %459, %758, %cst_127 {dimension_numbers = #tpu.dot_dimension_numbers<[1], [0], [0], [1], [0, 0, 1, 1], [], []>} : vector<8x32xf32>, vector<32x32xf32>, vector<8x32xf32> -> vector<8x32xf32>
    %760 = arith.addf %756, %759 : vector<8x32xf32>
    %c3 = arith.constant 3 : index
    %c0_128 = arith.constant 0 : index
    %c0_129 = arith.constant 0 : index
    %761 = vector.load %arg5[%c3, %c0_128, %c0_129] : memref<8x32x32xf32, #tpu.memory_space<vmem>>, vector<1x32x32xf32>
    %762 = vector.shape_cast %761 : vector<1x32x32xf32> to vector<32x32xf32>
    %cst_130 = arith.constant dense<0.000000e+00> : vector<8x32xf32>
    %763 = tpu.matmul %517, %762, %cst_130 {dimension_numbers = #tpu.dot_dimension_numbers<[1], [0], [0], [1], [0, 0, 1, 1], [], []>} : vector<8x32xf32>, vector<32x32xf32>, vector<8x32xf32> -> vector<8x32xf32>
    %764 = arith.addf %760, %763 : vector<8x32xf32>
    %c4 = arith.constant 4 : index
    %c0_131 = arith.constant 0 : index
    %c0_132 = arith.constant 0 : index
    %765 = vector.load %arg5[%c4, %c0_131, %c0_132] : memref<8x32x32xf32, #tpu.memory_space<vmem>>, vector<1x32x32xf32>
    %766 = vector.shape_cast %765 : vector<1x32x32xf32> to vector<32x32xf32>
    %cst_133 = arith.constant dense<0.000000e+00> : vector<8x32xf32>
    %767 = tpu.matmul %575, %766, %cst_133 {dimension_numbers = #tpu.dot_dimension_numbers<[1], [0], [0], [1], [0, 0, 1, 1], [], []>} : vector<8x32xf32>, vector<32x32xf32>, vector<8x32xf32> -> vector<8x32xf32>
    %768 = arith.addf %764, %767 : vector<8x32xf32>
    %c5 = arith.constant 5 : index
    %c0_134 = arith.constant 0 : index
    %c0_135 = arith.constant 0 : index
    %769 = vector.load %arg5[%c5, %c0_134, %c0_135] : memref<8x32x32xf32, #tpu.memory_space<vmem>>, vector<1x32x32xf32>
    %770 = vector.shape_cast %769 : vector<1x32x32xf32> to vector<32x32xf32>
    %cst_136 = arith.constant dense<0.000000e+00> : vector<8x32xf32>
    %771 = tpu.matmul %633, %770, %cst_136 {dimension_numbers = #tpu.dot_dimension_numbers<[1], [0], [0], [1], [0, 0, 1, 1], [], []>} : vector<8x32xf32>, vector<32x32xf32>, vector<8x32xf32> -> vector<8x32xf32>
    %772 = arith.addf %768, %771 : vector<8x32xf32>
    %c6 = arith.constant 6 : index
    %c0_137 = arith.constant 0 : index
    %c0_138 = arith.constant 0 : index
    %773 = vector.load %arg5[%c6, %c0_137, %c0_138] : memref<8x32x32xf32, #tpu.memory_space<vmem>>, vector<1x32x32xf32>
    %774 = vector.shape_cast %773 : vector<1x32x32xf32> to vector<32x32xf32>
    %cst_139 = arith.constant dense<0.000000e+00> : vector<8x32xf32>
    %775 = tpu.matmul %691, %774, %cst_139 {dimension_numbers = #tpu.dot_dimension_numbers<[1], [0], [0], [1], [0, 0, 1, 1], [], []>} : vector<8x32xf32>, vector<32x32xf32>, vector<8x32xf32> -> vector<8x32xf32>
    %776 = arith.addf %772, %775 : vector<8x32xf32>
    %c7 = arith.constant 7 : index
    %c0_140 = arith.constant 0 : index
    %c0_141 = arith.constant 0 : index
    %777 = vector.load %arg5[%c7, %c0_140, %c0_141] : memref<8x32x32xf32, #tpu.memory_space<vmem>>, vector<1x32x32xf32>
    %778 = vector.shape_cast %777 : vector<1x32x32xf32> to vector<32x32xf32>
    %cst_142 = arith.constant dense<0.000000e+00> : vector<8x32xf32>
    %779 = tpu.matmul %749, %778, %cst_142 {dimension_numbers = #tpu.dot_dimension_numbers<[1], [0], [0], [1], [0, 0, 1, 1], [], []>} : vector<8x32xf32>, vector<32x32xf32>, vector<8x32xf32> -> vector<8x32xf32>
    %780 = arith.addf %776, %779 : vector<8x32xf32>
    %781 = vector.broadcast %11 : vector<1x32xf32> to vector<8x32xf32>
    %782 = arith.addf %780, %781 : vector<8x32xf32>
    %783 = vector.extract_strided_slice %782 {offsets = [0, 0], sizes = [8, 16], strides = [1, 1]} : vector<8x32xf32> to vector<8x16xf32>
    %c0_143 = arith.constant 0 : index
    %c0_144 = arith.constant 0 : index
    %784 = vector.load %arg6[%c0_143, %c0_144] : memref<16x16xf32, #tpu.memory_space<vmem>>, vector<16x16xf32>
    %cst_145 = arith.constant dense<0.000000e+00> : vector<8x16xf32>
    %785 = tpu.matmul %783, %784, %cst_145 {dimension_numbers = #tpu.dot_dimension_numbers<[1], [0], [0], [1], [0, 0, 1, 1], [], []>} : vector<8x16xf32>, vector<16x16xf32>, vector<8x16xf32> -> vector<8x16xf32>
    %786 = vector.broadcast %10 : vector<1x16xf32> to vector<8x16xf32>
    %787 = arith.addf %785, %786 : vector<8x16xf32>
    %cst_146 = arith.constant 0.000000e+00 : f32
    %788 = vector.broadcast %cst_146 : f32 to vector<8x16xf32>
    %789 = arith.maximumf %787, %788 : vector<8x16xf32>
    %c0_147 = arith.constant 0 : index
    %c0_148 = arith.constant 0 : index
    %790 = vector.load %arg7[%c0_147, %c0_148] : memref<16x32xf32, #tpu.memory_space<vmem>>, vector<16x32xf32>
    %cst_149 = arith.constant dense<0.000000e+00> : vector<8x32xf32>
    %791 = tpu.matmul %789, %790, %cst_149 {dimension_numbers = #tpu.dot_dimension_numbers<[1], [0], [0], [1], [0, 0, 1, 1], [], []>} : vector<8x16xf32>, vector<16x32xf32>, vector<8x32xf32> -> vector<8x32xf32>
    %792 = vector.broadcast %12 : vector<1x32xf32> to vector<8x32xf32>
    %793 = arith.addf %791, %792 : vector<8x32xf32>
    %cst_150 = arith.constant 0.000000e+00 : f32
    %794 = vector.broadcast %cst_150 : f32 to vector<8x32xf32>
    %795 = arith.maximumf %793, %794 : vector<8x32xf32>
    %c0_151 = arith.constant 0 : index
    %c0_152 = arith.constant 0 : index
    %796 = vector.load %arg8[%c0_151, %c0_152] : memref<16x64xf32, #tpu.memory_space<vmem>>, vector<16x64xf32>
    %797 = arith.mulf %783, %783 : vector<8x16xf32>
    %cst_153 = arith.constant dense<0.000000e+00> : vector<8xf32>
    %798 = vector.multi_reduction <add>, %797, %cst_153 [1] : vector<8x16xf32> to vector<8xf32>
    %799 = vector.shape_cast %798 : vector<8xf32> to vector<8x1xf32>
    %800 = arith.mulf %796, %796 : vector<16x64xf32>
    %cst_154 = arith.constant dense<0.000000e+00> : vector<64xf32>
    %801 = vector.multi_reduction <add>, %800, %cst_154 [0] : vector<16x64xf32> to vector<64xf32>
    %802 = vector.shape_cast %801 : vector<64xf32> to vector<1x64xf32>
    %803 = vector.broadcast %799 : vector<8x1xf32> to vector<8x64xf32>
    %804 = vector.broadcast %802 : vector<1x64xf32> to vector<8x64xf32>
    %805 = arith.addf %803, %804 : vector<8x64xf32>
    %cst_155 = arith.constant dense<0.000000e+00> : vector<8x64xf32>
    %806 = tpu.matmul %783, %796, %cst_155 {dimension_numbers = #tpu.dot_dimension_numbers<[1], [0], [0], [1], [0, 0, 1, 1], [], []>} : vector<8x16xf32>, vector<16x64xf32>, vector<8x64xf32> -> vector<8x64xf32>
    %cst_156 = arith.constant 2.000000e+00 : f32
    %807 = vector.broadcast %cst_156 : f32 to vector<8x64xf32>
    %808 = arith.mulf %807, %806 : vector<8x64xf32>
    %809 = arith.subf %805, %808 : vector<8x64xf32>
    %cst_157 = arith.constant dense<0x7F800000> : vector<8xf32>
    %810 = vector.multi_reduction <minimumf>, %809, %cst_157 [1] : vector<8x64xf32> to vector<8xf32>
    %811 = vector.shape_cast %810 : vector<8xf32> to vector<8x1xf32>
    %812 = tpu.iota {dimensions = array<i32: 1>} : vector<8x64xi32>
    %813 = vector.broadcast %811 : vector<8x1xf32> to vector<8x64xf32>
    %814 = arith.cmpf oeq, %809, %813 : vector<8x64xf32>
    %c64_i32 = arith.constant 64 : i32
    %815 = vector.broadcast %c64_i32 : i32 to vector<8x64xi32>
    %816 = arith.select %814, %812, %815 : vector<8x64xi1>, vector<8x64xi32>
    %cst_158 = arith.constant dense<2147483647> : vector<8xi32>
    %817 = vector.multi_reduction <minsi>, %816, %cst_158 [1] : vector<8x64xi32> to vector<8xi32>
    %818 = vector.shape_cast %817 : vector<8xi32> to vector<8x1xi32>
    %819 = tpu.iota {dimensions = array<i32: 1>} : vector<8x32xi32>
    %c19_i32 = arith.constant 19 : i32
    %820 = vector.broadcast %c19_i32 : i32 to vector<8x32xi32>
    %821 = arith.cmpi eq, %819, %820 : vector<8x32xi32>
    %822 = arith.sitofp %818 : vector<8x1xi32> to vector<8x1xf32>
    %cst_159 = arith.constant 0.000000e+00 : f32
    %823 = vector.shape_cast %822 : vector<8x1xf32> to vector<8x1xf32>
    %824 = vector.broadcast %823 : vector<8x1xf32> to vector<8x32xf32>
    %825 = vector.broadcast %cst_159 : f32 to vector<8x32xf32>
    %826 = arith.select %821, %824, %825 : vector<8x32xi1>, vector<8x32xf32>
    %827 = arith.addf %782, %795 : vector<8x32xf32>
    %828 = arith.addf %827, %826 : vector<8x32xf32>
    %c0_160 = arith.constant 0 : index
    %c0_161 = arith.constant 0 : index
    %829 = vector.load %arg9[%c0_160, %c0_161] : memref<8x32xf32, #tpu.memory_space<vmem>>, vector<8x32xf32>
    tpu.vector_store %arg9[%c0_160, %c0_161], %828 {strides = array<i32>} : memref<8x32xf32, #tpu.memory_space<vmem>>, vector<8x32xf32>,
    return
  }
  func.func @transform_0(%arg0: i32) -> (i32, i32) {
    %c0_i32 = arith.constant 0 : i32
    %c0_i32_0 = arith.constant 0 : i32
    return %arg0, %c0_i32 : i32, i32
  }
  func.func @transform_1(%arg0: i32) -> (i32, i32) {
    %c0_i32 = arith.constant 0 : i32
    %c0_i32_0 = arith.constant 0 : i32
    return %arg0, %c0_i32 : i32, i32
  }
  func.func @transform_2(%arg0: i32) -> (i32, i32) {
    %c0_i32 = arith.constant 0 : i32
    %c0_i32_0 = arith.constant 0 : i32
    %c0_i32_1 = arith.constant 0 : i32
    return %c0_i32, %c0_i32_0 : i32, i32
  }
  func.func @transform_3(%arg0: i32) -> (i32, i32) {
    %c0_i32 = arith.constant 0 : i32
    %c0_i32_0 = arith.constant 0 : i32
    %c0_i32_1 = arith.constant 0 : i32
    return %c0_i32, %c0_i32_0 : i32, i32
  }
  func.func @transform_4(%arg0: i32) -> (i32, i32, i32) {
    %c0_i32 = arith.constant 0 : i32
    %c0_i32_0 = arith.constant 0 : i32
    %c0_i32_1 = arith.constant 0 : i32
    %c0_i32_2 = arith.constant 0 : i32
    return %c0_i32, %c0_i32_0, %c0_i32_1 : i32, i32, i32
  }
  func.func @transform_5(%arg0: i32) -> (i32, i32) {
    %c0_i32 = arith.constant 0 : i32
    %c0_i32_0 = arith.constant 0 : i32
    %c0_i32_1 = arith.constant 0 : i32
    return %c0_i32, %c0_i32_0 : i32, i32
  }
  func.func @transform_6(%arg0: i32) -> (i32, i32) {
    %c0_i32 = arith.constant 0 : i32
    %c0_i32_0 = arith.constant 0 : i32
    %c0_i32_1 = arith.constant 0 : i32
    return %c0_i32, %c0_i32_0 : i32, i32
  }
  func.func @transform_7(%arg0: i32) -> (i32, i32) {
    %c0_i32 = arith.constant 0 : i32
    %c0_i32_0 = arith.constant 0 : i32
    %c0_i32_1 = arith.constant 0 : i32
    return %c0_i32, %c0_i32_0 : i32, i32
  }
  func.func @transform_8(%arg0: i32) -> (i32, i32) {
    %c0_i32 = arith.constant 0 : i32
    %c0_i32_0 = arith.constant 0 : i32
    return %arg0, %c0_i32 : i32, i32
  }
}

</mosaic_0001>

<llo_original>
// kernel: tpu_custom_call.1
$region0: #{tpu_custom_call.1}
  #allocation0 [shape = 'u32[]', space=smem, size = 0x4, offset = 0x4, fixed_abs, tag = 'smem constant byte address 0x4 - core index']
  #allocation1 [shape = 'u32[72,128]{1,0:T(1,128)}', space=vmem, size = 0x9000, scoped, tag = 'internal scratch']
  %s0 = inlined_call_operand.hbm [shape: f32[8,64], index: 0, kind: input, shape index: {}]
  %s1 = inlined_call_operand.hbm [shape: f32[8,8], index: 1, kind: input, shape index: {}]
  %s2 = inlined_call_operand.hbm [shape: f32[16,32], index: 2, kind: input, shape index: {}]
  %s3 = inlined_call_operand.hbm [shape: f32[32,32], index: 3, kind: input, shape index: {}]
  %s4 = inlined_call_operand.hbm [shape: f32[8,32,32], index: 4, kind: input, shape index: {}]
  %s5 = inlined_call_operand.hbm [shape: f32[16,16], index: 5, kind: input, shape index: {}]
  %s6 = inlined_call_operand.hbm [shape: f32[16,32], index: 6, kind: input, shape index: {}]
  %s7 = inlined_call_operand.hbm [shape: f32[16,64], index: 7, kind: input, shape index: {}]
  %s8 = inlined_call_operand.hbm [shape: f32[8,32], index: 8, kind: output, shape index: {}]
  %s9 = sld [smem:[#allocation0]]
  $region74: #{tpu_custom_call.1} parent=0
    _
  %s11 = ssub.s32 1, %s9
  %s12 = scalar_select 0, %s11, %s9
  $region1: #{tpu_custom_call.1} parent=0
    #allocation2 [shape = 'u8[4096]{0}', space=vmem, size = 0x1000, scoped, tag = 'input window, operand 0, single buffered']
    #allocation3 [shape = 's32[1]{0}', space=sflag, size = 0x4, scoped, tag = 'scoped memory for tpu_custom_call.1']
    #allocation4 [shape = 's32[1]{0}', space=sflag, size = 0x4, scoped, tag = 'scoped memory for tpu_custom_call.1']
    #allocation5 [shape = 'u8[4096]{0}', space=vmem, size = 0x1000, scoped, tag = 'input window, operand 1, single buffered']
    #allocation6 [shape = 's32[1]{0}', space=sflag, size = 0x4, scoped, tag = 'scoped memory for tpu_custom_call.1']
    #allocation7 [shape = 'u8[8192]{0}', space=vmem, size = 0x2000, scoped, tag = 'input window, operand 2, single buffered']
    #allocation8 [shape = 'u8[16384]{0}', space=vmem, size = 0x4000, scoped, tag = 'input window, operand 3, single buffered']
    #allocation9 [shape = 's32[1]{0}', space=sflag, size = 0x4, scoped, tag = 'scoped memory for tpu_custom_call.1']
    #allocation10 [shape = 'u8[131072]{0}', space=vmem, size = 0x20000, scoped, tag = 'input window, operand 4, single buffered']
    #allocation11 [shape = 'u8[8192]{0}', space=vmem, size = 0x2000, scoped, tag = 'input window, operand 5, single buffered']
    #allocation12 [shape = 's32[1]{0}', space=sflag, size = 0x4, scoped, tag = 'scoped memory for tpu_custom_call.1']
    #allocation13 [shape = 'u8[8192]{0}', space=vmem, size = 0x2000, scoped, tag = 'input window, operand 6, single buffered']
    #allocation14 [shape = 'u8[8192]{0}', space=vmem, size = 0x2000, scoped, tag = 'input window, operand 7, single buffered']
    #allocation15 [shape = 's32[1]{0}', space=sflag, size = 0x4, scoped, tag = 'scoped memory for tpu_custom_call.1']
    #allocation16 [shape = 'u8[4096]{0}', space=vmem, size = 0x1000, scoped, tag = 'output window, operand 0, single buffered']
    %13 = vsyncpa [#allocation3], 0
    %14 = vsyncpa [#allocation6], 0
    %15 = vsyncpa [#allocation9], 0
    %16 = vsyncpa [#allocation12], 0
    %17 = vsyncpa [#allocation15], 0
    %18 = vsyncpa [#allocation4], 0
    // Predicated region
    $region2: #{tpu_custom_call.1} parent=1 // pred_check
      _
    $region3: #{tpu_custom_call.1} parent=1 // pred_check_branch
      %20 = sbr.rel (0) target = $region5
    $region4: #{tpu_custom_call.1} parent=1 // pred_region
      %22 = vsyncadd [#allocation3], 0
      %s24 = sshll.u32 %s0, 4
      %s25 = int_to_ptr.hbm [resolvable:$true] %s24
      %s26 = sshll.u32 [#allocation2], 4
      %s27 = int_to_ptr.vmem [resolvable:$true] %s26
      %29 = dma.hbm_to_vmem [thread:$0]  %s25, 128, %s27, [#allocation3]
    $region5: #{tpu_custom_call.1} parent=1 // pred_fallthru
      _
    // Predicated region
    $region6: #{tpu_custom_call.1} parent=1 // pred_check
      _
    $region7: #{tpu_custom_call.1} parent=1 // pred_check_branch
      %31 = sbr.rel (0) target = $region9
    $region8: #{tpu_custom_call.1} parent=1 // pred_region
      %33 = vsyncadd [#allocation6], 0
      %s35 = sshll.u32 %s1, 4
      %s36 = int_to_ptr.hbm [resolvable:$true] %s35
      %s37 = sshll.u32 [#allocation5], 4
      %s38 = int_to_ptr.vmem [resolvable:$true] %s37
      %40 = dma.hbm_to_vmem [thread:$0]  %s36, 128, %s38, [#allocation6]
    $region9: #{tpu_custom_call.1} parent=1 // pred_fallthru
      _
    // Predicated region
    $region10: #{tpu_custom_call.1} parent=1 // pred_check
      _
    $region11: #{tpu_custom_call.1} parent=1 // pred_check_branch
      %42 = sbr.rel (0) target = $region13
    $region12: #{tpu_custom_call.1} parent=1 // pred_region
      %44 = vsyncadd [#allocation6], 0
      %s45 = sshll.u32 %s2, 4
      %s46 = int_to_ptr.hbm [resolvable:$true] %s45
      %s47 = sshll.u32 [#allocation7], 4
      %s48 = int_to_ptr.vmem [resolvable:$true] %s47
      %53 = dma.hbm_to_vmem [thread:$0]  %s46, 256, %s48, [#allocation6], 128, 128, 8
    $region13: #{tpu_custom_call.1} parent=1 // pred_fallthru
      _
    // Predicated region
    $region14: #{tpu_custom_call.1} parent=1 // pred_check
      _
    $region15: #{tpu_custom_call.1} parent=1 // pred_check_branch
      %55 = sbr.rel (0) target = $region17
    $region16: #{tpu_custom_call.1} parent=1 // pred_region
      %57 = vsyncadd [#allocation9], 0
      %s58 = sshll.u32 %s3, 4
      %s59 = int_to_ptr.hbm [resolvable:$true] %s58
      %s60 = sshll.u32 [#allocation8], 4
      %s61 = int_to_ptr.vmem [resolvable:$true] %s60
      %66 = dma.hbm_to_vmem [thread:$0]  %s59, 512, %s61, [#allocation9], 128, 128, 8
    $region17: #{tpu_custom_call.1} parent=1 // pred_fallthru
      _
    // Predicated region
    $region18: #{tpu_custom_call.1} parent=1 // pred_check
      _
    $region19: #{tpu_custom_call.1} parent=1 // pred_check_branch
      %68 = sbr.rel (0) target = $region21
    $region20: #{tpu_custom_call.1} parent=1 // pred_region
      %70 = vsyncadd [#allocation9], 0
      %s71 = sshll.u32 %s4, 4
      %s72 = int_to_ptr.hbm [resolvable:$true] %s71
      %s73 = sshll.u32 [#allocation10], 4
      %s74 = int_to_ptr.vmem [resolvable:$true] %s73
      %79 = dma.hbm_to_vmem [thread:$0]  %s72, 4096, %s74, [#allocation9], 128, 128, 8
    $region21: #{tpu_custom_call.1} parent=1 // pred_fallthru
      _
    // Predicated region
    $region22: #{tpu_custom_call.1} parent=1 // pred_check
      _
    $region23: #{tpu_custom_call.1} parent=1 // pred_check_branch
      %81 = sbr.rel (0) target = $region25
    $region24: #{tpu_custom_call.1} parent=1 // pred_region
      %83 = vsyncadd [#allocation12], 0
      %s84 = sshll.u32 %s5, 4
      %s85 = int_to_ptr.hbm [resolvable:$true] %s84
      %s86 = sshll.u32 [#allocation11], 4
      %s87 = int_to_ptr.vmem [resolvable:$true] %s86
      %92 = dma.hbm_to_vmem [thread:$0]  %s85, 256, %s87, [#allocation12], 128, 128, 8
    $region25: #{tpu_custom_call.1} parent=1 // pred_fallthru
      _
    // Predicated region
    $region26: #{tpu_custom_call.1} parent=1 // pred_check
      _
    $region27: #{tpu_custom_call.1} parent=1 // pred_check_branch
      %94 = sbr.rel (0) target = $region29
    $region28: #{tpu_custom_call.1} parent=1 // pred_region
      %96 = vsyncadd [#allocation12], 0
      %s97 = sshll.u32 %s6, 4
      %s98 = int_to_ptr.hbm [resolvable:$true] %s97
      %s99 = sshll.u32 [#allocation13], 4
      %s100 = int_to_ptr.vmem [resolvable:$true] %s99
      %105 = dma.hbm_to_vmem [thread:$0]  %s98, 256, %s100, [#allocation12], 128, 128, 8
    $region29: #{tpu_custom_call.1} parent=1 // pred_fallthru
      _
    // Predicated region
    $region30: #{tpu_custom_call.1} parent=1 // pred_check
      _
    $region31: #{tpu_custom_call.1} parent=1 // pred_check_branch
      %107 = sbr.rel (0) target = $region33
    $region32: #{tpu_custom_call.1} parent=1 // pred_region
      %109 = vsyncadd [#allocation15], 0
      %s110 = sshll.u32 %s7, 4
      %s111 = int_to_ptr.hbm [resolvable:$true] %s110
      %s112 = sshll.u32 [#allocation14], 4
      %s113 = int_to_ptr.vmem [resolvable:$true] %s112
      %118 = dma.hbm_to_vmem [thread:$0]  %s111, 256, %s113, [#allocation15], 128, 128, 8
    $region33: #{tpu_custom_call.1} parent=1 // pred_fallthru
      _
    // Predicated region
    $region34: #{tpu_custom_call.1} parent=1 // pred_check
      _
    $region35: #{tpu_custom_call.1} parent=1 // pred_check_branch
      %120 = sbr.rel (0) target = $region37
    $region36: #{tpu_custom_call.1} parent=1 // pred_region
      %122 = dma.done [#allocation3], 128
    $region37: #{tpu_custom_call.1} parent=1 // pred_fallthru
      _
    // Predicated region
    $region38: #{tpu_custom_call.1} parent=1 // pred_check
      _
    $region39: #{tpu_custom_call.1} parent=1 // pred_check_branch
      %124 = sbr.rel (0) target = $region41
    $region40: #{tpu_custom_call.1} parent=1 // pred_region
      %126 = dma.done [#allocation6], 128
    $region41: #{tpu_custom_call.1} parent=1 // pred_fallthru
      _
    // Predicated region
    $region42: #{tpu_custom_call.1} parent=1 // pred_check
      _
    $region43: #{tpu_custom_call.1} parent=1 // pred_check_branch
      %128 = sbr.rel (0) target = $region45
    $region44: #{tpu_custom_call.1} parent=1 // pred_region
      %130 = dma.done [#allocation6], 256
    $region45: #{tpu_custom_call.1} parent=1 // pred_fallthru
      _
    // Predicated region
    $region46: #{tpu_custom_call.1} parent=1 // pred_check
      _
    $region47: #{tpu_custom_call.1} parent=1 // pred_check_branch
      %132 = sbr.rel (0) target = $region49
    $region48: #{tpu_custom_call.1} parent=1 // pred_region
      %134 = dma.done [#allocation9], 512
    $region49: #{tpu_custom_call.1} parent=1 // pred_fallthru
      _
    // Predicated region
    $region50: #{tpu_custom_call.1} parent=1 // pred_check
      _
    $region51: #{tpu_custom_call.1} parent=1 // pred_check_branch
      %136 = sbr.rel (0) target = $region53
    $region52: #{tpu_custom_call.1} parent=1 // pred_region
      %138 = dma.done [#allocation9], 4096
    $region53: #{tpu_custom_call.1} parent=1 // pred_fallthru
      _
    // Predicated region
    $region54: #{tpu_custom_call.1} parent=1 // pred_check
      _
    $region55: #{tpu_custom_call.1} parent=1 // pred_check_branch
      %140 = sbr.rel (0) target = $region57
    $region56: #{tpu_custom_call.1} parent=1 // pred_region
      %142 = dma.done [#allocation12], 256
    $region57: #{tpu_custom_call.1} parent=1 // pred_fallthru
      _
    // Predicated region
    $region58: #{tpu_custom_call.1} parent=1 // pred_check
      _
    $region59: #{tpu_custom_call.1} parent=1 // pred_check_branch
      %144 = sbr.rel (0) target = $region61
    $region60: #{tpu_custom_call.1} parent=1 // pred_region
      %146 = dma.done [#allocation12], 256
    $region61: #{tpu_custom_call.1} parent=1 // pred_fallthru
      _
    // Predicated region
    $region62: #{tpu_custom_call.1} parent=1 // pred_check
      _
    $region63: #{tpu_custom_call.1} parent=1 // pred_check_branch
      %148 = sbr.rel (0) target = $region65
    $region64: #{tpu_custom_call.1} parent=1 // pred_region
      %150 = dma.done [#allocation15], 256
    $region65: #{tpu_custom_call.1} parent=1 // pred_fallthru
      _
    %v151 = vld [vmem:[#allocation2] sm:$0xff]
    %v152 = vld [vmem:[#allocation5] sm:$0xff]
    %v153 = vld [vmem:[#allocation7] sm:$0xff]
    %v154 = vld [vmem:[#allocation7 + $0x8] sm:$0xff]
    %v155 = vmul.f32 %v151, %v152
    %vm156 = vcmask 64512
    %v157 = vsel %vm156, %v155, 0.0
    %158 = vadd.xlane.f32.xlu0 %v157
    %v159 = vpop.xlane.xlu0 %158
    %v160 = vperm.slane %v153, 6
    %v161 = vmul.f32 %v159, %v160
    %v162 = vperm.slane %v153, 0
    %v163 = vadd.f32 %v161, %v162
    %vm164 = vcmask 261120
    %v165 = vsel %vm164, %v163, 0.0
    %166 = vadd.xlane.f32.xlu0 %v165
    %v167 = vpop.xlane.xlu0 %166
    %v168 = vrcp.pop 32.0
    %v169 = vmul.f32 32.0, %v168
    %v170 = vsub.f32 1.0, %v169
    %v171 = vmul.f32 %v168, %v170
    %v172 = vadd.f32 %v168, %v171
    %vm173 = vweird.f32 %v168
    %v174 = vsel %vm173, %v168, %v172
    %v175 = vmul.f32 %v167, %v174
    %v176 = vsub.f32 %v163, %v175
    %v177 = vmul.f32 %v176, %v176
    %v178 = vsel %vm164, %v177, 0.0
    %179 = vadd.xlane.f32.xlu0 %v178
    %v180 = vpop.xlane.xlu0 %179
    %v181 = vmul.f32 %v180, %v174
    %v182 = vadd.f32 %v181, 1e-05
    %v183 = vrsqrt.pop %v182
    %v184 = vmul.f32 %v183, %v182
    %v185 = vmul.f32 %v184, %v183
    %v186 = vmul.f32 0.5, %v185
    %v187 = vsub.f32 1.5, %v186
    %v188 = vmul.f32 %v183, %v187
    %vm189 = vweird.f32 %v182
    %vm190 = vweird.f32 %v183
    %vm191 = vmor %vm189, %vm190
    %v192 = vsel %vm191, %v183, %v188
    %v193 = vmul.f32 %v176, %v192
    %v194 = vperm.slane %v153, 1
    %v195 = vmul.f32 %v193, %v194
    %v196 = vperm.slane %v153, 2
    %v197 = vadd.f32 %v195, %v196
    %v198 = vmax.f32 %v197, 0.0
    %200 = vrot.lane.b32.xlu0 %v152, 8
    %v201 = vpop.permute.xlu0 %200
    %v203 = vmul.f32 %v151, %v201
    %205 = vrot.lane.b32.xlu0 %v203, 120
    %v206 = vpop.permute.xlu0 %205
    %v208 = vsel %vm156, %v206, 0.0
    %209 = vadd.xlane.f32.xlu0 %v208
    %v210 = vpop.xlane.xlu0 %209
    %v211 = vmul.f32 %v210, %v160
    %v212 = vadd.f32 %v211, %v162
    %v213 = vsel %vm164, %v212, 0.0
    %214 = vadd.xlane.f32.xlu0 %v213
    %v215 = vpop.xlane.xlu0 %214
    %v216 = vmul.f32 %v215, %v174
    %v217 = vsub.f32 %v212, %v216
    %v218 = vmul.f32 %v217, %v217
    %v219 = vsel %vm164, %v218, 0.0
    %220 = vadd.xlane.f32.xlu0 %v219
    %v221 = vpop.xlane.xlu0 %220
    %v222 = vmul.f32 %v221, %v174
    %v223 = vadd.f32 %v222, 1e-05
    %v224 = vrsqrt.pop %v223
    %v225 = vmul.f32 %v224, %v223
    %v226 = vmul.f32 %v225, %v224
    %v227 = vmul.f32 0.5, %v226
    %v228 = vsub.f32 1.5, %v227
    %v229 = vmul.f32 %v224, %v228
    %vm230 = vweird.f32 %v223
    %vm231 = vweird.f32 %v224
    %vm232 = vmor %vm230, %vm231
    %v233 = vsel %vm232, %v224, %v229
    %v234 = vmul.f32 %v217, %v233
    %v235 = vmul.f32 %v234, %v194
    %v236 = vadd.f32 %v235, %v196
    %v237 = vmax.f32 %v236, 0.0
    %238 = vrot.lane.b32.xlu0 %v152, 16
    %v239 = vpop.permute.xlu0 %238
    %v241 = vmul.f32 %v151, %v239
    %243 = vrot.lane.b32.xlu0 %v241, 112
    %v244 = vpop.permute.xlu0 %243
    %v246 = vsel %vm156, %v244, 0.0
    %247 = vadd.xlane.f32.xlu0 %v246
    %v248 = vpop.xlane.xlu0 %247
    %v249 = vmul.f32 %v248, %v160
    %v250 = vadd.f32 %v249, %v162
    %v251 = vsel %vm164, %v250, 0.0
    %252 = vadd.xlane.f32.xlu0 %v251
    %v253 = vpop.xlane.xlu0 %252
    %v254 = vmul.f32 %v253, %v174
    %v255 = vsub.f32 %v250, %v254
    %v256 = vmul.f32 %v255, %v255
    %v257 = vsel %vm164, %v256, 0.0
    %258 = vadd.xlane.f32.xlu0 %v257
    %v259 = vpop.xlane.xlu0 %258
    %v260 = vmul.f32 %v259, %v174
    %v261 = vadd.f32 %v260, 1e-05
    %v262 = vrsqrt.pop %v261
    %v263 = vmul.f32 %v262, %v261
    %v264 = vmul.f32 %v263, %v262
    %v265 = vmul.f32 0.5, %v264
    %v266 = vsub.f32 1.5, %v265
    %v267 = vmul.f32 %v262, %v266
    %vm268 = vweird.f32 %v261
    %vm269 = vweird.f32 %v262
    %vm270 = vmor %vm268, %vm269
    %v271 = vsel %vm270, %v262, %v267
    %v272 = vmul.f32 %v255, %v271
    %v273 = vmul.f32 %v272, %v194
    %v274 = vadd.f32 %v273, %v196
    %v275 = vmax.f32 %v274, 0.0
    %276 = vrot.lane.b32.xlu0 %v152, 24
    %v277 = vpop.permute.xlu0 %276
    %v279 = vmul.f32 %v151, %v277
    %281 = vrot.lane.b32.xlu0 %v279, 104
    %v282 = vpop.permute.xlu0 %281
    %v284 = vsel %vm156, %v282, 0.0
    %285 = vadd.xlane.f32.xlu0 %v284
    %v286 = vpop.xlane.xlu0 %285
    %v287 = vmul.f32 %v286, %v160
    %v288 = vadd.f32 %v287, %v162
    %v289 = vsel %vm164, %v288, 0.0
    %290 = vadd.xlane.f32.xlu0 %v289
    %v291 = vpop.xlane.xlu0 %290
    %v292 = vmul.f32 %v291, %v174
    %v293 = vsub.f32 %v288, %v292
    %v294 = vmul.f32 %v293, %v293
    %v295 = vsel %vm164, %v294, 0.0
    %296 = vadd.xlane.f32.xlu0 %v295
    %v297 = vpop.xlane.xlu0 %296
    %v298 = vmul.f32 %v297, %v174
    %v299 = vadd.f32 %v298, 1e-05
    %v300 = vrsqrt.pop %v299
    %v301 = vmul.f32 %v300, %v299
    %v302 = vmul.f32 %v301, %v300
    %v303 = vmul.f32 0.5, %v302
    %v304 = vsub.f32 1.5, %v303
    %v305 = vmul.f32 %v300, %v304
    %vm306 = vweird.f32 %v299
    %vm307 = vweird.f32 %v300
    %vm308 = vmor %vm306, %vm307
    %v309 = vsel %vm308, %v300, %v305
    %v310 = vmul.f32 %v293, %v309
    %v311 = vmul.f32 %v310, %v194
    %v312 = vadd.f32 %v311, %v196
    %v313 = vmax.f32 %v312, 0.0
    %314 = vrot.lane.b32.xlu0 %v152, 32
    %v315 = vpop.permute.xlu0 %314
    %v317 = vmul.f32 %v151, %v315
    %319 = vrot.lane.b32.xlu0 %v317, 96
    %v320 = vpop.permute.xlu0 %319
    %v322 = vsel %vm156, %v320, 0.0
    %323 = vadd.xlane.f32.xlu0 %v322
    %v324 = vpop.xlane.xlu0 %323
    %v325 = vmul.f32 %v324, %v160
    %v326 = vadd.f32 %v325, %v162
    %v327 = vsel %vm164, %v326, 0.0
    %328 = vadd.xlane.f32.xlu0 %v327
    %v329 = vpop.xlane.xlu0 %328
    %v330 = vmul.f32 %v329, %v174
    %v331 = vsub.f32 %v326, %v330
    %v332 = vmul.f32 %v331, %v331
    %v333 = vsel %vm164, %v332, 0.0
    %334 = vadd.xlane.f32.xlu0 %v333
    %v335 = vpop.xlane.xlu0 %334
    %v336 = vmul.f32 %v335, %v174
    %v337 = vadd.f32 %v336, 1e-05
    %v338 = vrsqrt.pop %v337
    %v339 = vmul.f32 %v338, %v337
    %v340 = vmul.f32 %v339, %v338
    %v341 = vmul.f32 0.5, %v340
    %v342 = vsub.f32 1.5, %v341
    %v343 = vmul.f32 %v338, %v342
    %vm344 = vweird.f32 %v337
    %vm345 = vweird.f32 %v338
    %vm346 = vmor %vm344, %vm345
    %v347 = vsel %vm346, %v338, %v343
    %v348 = vmul.f32 %v331, %v347
    %v349 = vmul.f32 %v348, %v194
    %v350 = vadd.f32 %v349, %v196
    %v351 = vmax.f32 %v350, 0.0
    %352 = vrot.lane.b32.xlu0 %v152, 40
    %v353 = vpop.permute.xlu0 %352
    %v355 = vmul.f32 %v151, %v353
    %357 = vrot.lane.b32.xlu0 %v355, 88
    %v358 = vpop.permute.xlu0 %357
    %v360 = vsel %vm156, %v358, 0.0
    %361 = vadd.xlane.f32.xlu0 %v360
    %v362 = vpop.xlane.xlu0 %361
    %v363 = vmul.f32 %v362, %v160
    %v364 = vadd.f32 %v363, %v162
    %v365 = vsel %vm164, %v364, 0.0
    %366 = vadd.xlane.f32.xlu0 %v365
    %v367 = vpop.xlane.xlu0 %366
    %v368 = vmul.f32 %v367, %v174
    %v369 = vsub.f32 %v364, %v368
    %v370 = vmul.f32 %v369, %v369
    %v371 = vsel %vm164, %v370, 0.0
    %372 = vadd.xlane.f32.xlu0 %v371
    %v373 = vpop.xlane.xlu0 %372
    %v374 = vmul.f32 %v373, %v174
    %v375 = vadd.f32 %v374, 1e-05
    %v376 = vrsqrt.pop %v375
    %v377 = vmul.f32 %v376, %v375
    %v378 = vmul.f32 %v377, %v376
    %v379 = vmul.f32 0.5, %v378
    %v380 = vsub.f32 1.5, %v379
    %v381 = vmul.f32 %v376, %v380
    %vm382 = vweird.f32 %v375
    %vm383 = vweird.f32 %v376
    %vm384 = vmor %vm382, %vm383
    %v385 = vsel %vm384, %v376, %v381
    %v386 = vmul.f32 %v369, %v385
    %v387 = vmul.f32 %v386, %v194
    %v388 = vadd.f32 %v387, %v196
    %v389 = vmax.f32 %v388, 0.0
    %390 = vrot.lane.b32.xlu0 %v152, 48
    %v391 = vpop.permute.xlu0 %390
    %v393 = vmul.f32 %v151, %v391
    %395 = vrot.lane.b32.xlu0 %v393, 80
    %v396 = vpop.permute.xlu0 %395
    %v398 = vsel %vm156, %v396, 0.0
    %399 = vadd.xlane.f32.xlu0 %v398
    %v400 = vpop.xlane.xlu0 %399
    %v401 = vmul.f32 %v400, %v160
    %v402 = vadd.f32 %v401, %v162
    %v403 = vsel %vm164, %v402, 0.0
    %404 = vadd.xlane.f32.xlu0 %v403
    %v405 = vpop.xlane.xlu0 %404
    %v406 = vmul.f32 %v405, %v174
    %v407 = vsub.f32 %v402, %v406
    %v408 = vmul.f32 %v407, %v407
    %v409 = vsel %vm164, %v408, 0.0
    %410 = vadd.xlane.f32.xlu0 %v409
    %v411 = vpop.xlane.xlu0 %410
    %v412 = vmul.f32 %v411, %v174
    %v413 = vadd.f32 %v412, 1e-05
    %v414 = vrsqrt.pop %v413
    %v415 = vmul.f32 %v414, %v413
    %v416 = vmul.f32 %v415, %v414
    %v417 = vmul.f32 0.5, %v416
    %v418 = vsub.f32 1.5, %v417
    %v419 = vmul.f32 %v414, %v418
    %vm420 = vweird.f32 %v413
    %vm421 = vweird.f32 %v414
    %vm422 = vmor %vm420, %vm421
    %v423 = vsel %vm422, %v414, %v419
    %v424 = vmul.f32 %v407, %v423
    %v425 = vmul.f32 %v424, %v194
    %v426 = vadd.f32 %v425, %v196
    %v427 = vmax.f32 %v426, 0.0
    %428 = vrot.lane.b32.xlu0 %v152, 56
    %v429 = vpop.permute.xlu0 %428
    %v431 = vmul.f32 %v151, %v429
    %433 = vrot.lane.b32.xlu0 %v431, 72
    %v434 = vpop.permute.xlu0 %433
    %v436 = vsel %vm156, %v434, 0.0
    %437 = vadd.xlane.f32.xlu0 %v436
    %v438 = vpop.xlane.xlu0 %437
    %v439 = vmul.f32 %v438, %v160
    %v440 = vadd.f32 %v439, %v162
    %v441 = vsel %vm164, %v440, 0.0
    %442 = vadd.xlane.f32.xlu0 %v441
    %v443 = vpop.xlane.xlu0 %442
    %v444 = vmul.f32 %v443, %v174
    %v445 = vsub.f32 %v440, %v444
    %v446 = vmul.f32 %v445, %v445
    %v447 = vsel %vm164, %v446, 0.0
    %448 = vadd.xlane.f32.xlu0 %v447
    %v449 = vpop.xlane.xlu0 %448
    %v450 = vmul.f32 %v449, %v174
    %v451 = vadd.f32 %v450, 1e-05
    %v452 = vrsqrt.pop %v451
    %v453 = vmul.f32 %v452, %v451
    %v454 = vmul.f32 %v453, %v452
    %v455 = vmul.f32 0.5, %v454
    %v456 = vsub.f32 1.5, %v455
    %v457 = vmul.f32 %v452, %v456
    %vm458 = vweird.f32 %v451
    %vm459 = vweird.f32 %v452
    %vm460 = vmor %vm458, %vm459
    %v461 = vsel %vm460, %v452, %v457
    %v462 = vmul.f32 %v445, %v461
    %v463 = vmul.f32 %v462, %v194
    %v464 = vadd.f32 %v463, %v196
    %v465 = vmax.f32 %v464, 0.0
    %v466 = vld [vmem:[#allocation8] sm:$0xff]
    %v467 = vld [vmem:[#allocation8 + $0x8] sm:$0xff]
    %v468 = vld [vmem:[#allocation8 + $0x10] sm:$0xff]
    %v469 = vld [vmem:[#allocation8 + $0x18] sm:$0xff]
    %v471 = vsel %vm164, %v198, 0
    %473 = vmatpush.msra.mxu0 0.0
    %474 = vmatpush.msra.mxu0 0.0
    %475 = vmatpush.msra.mxu0 0.0
    %476 = vmatpush.msra.mxu0 0.0
    %477 = vmatpush.msra.mxu0 0.0
    %478 = vmatpush.msra.mxu0 0.0
    %479 = vmatpush.msra.mxu0 0.0
    %480 = vmatpush.msra.mxu0 0.0
    %481 = vmatpush.msra.mxu0 0.0
    %482 = vmatpush.msra.mxu0 0.0
    %483 = vmatpush.msra.mxu0 0.0
    %484 = vmatpush.msra.mxu0 0.0
    %485 = vmatpush.msra.mxu0 %v469
    %486 = vmatpush.msra.mxu0 %v468
    %487 = vmatpush.msra.mxu0 %v467
    %488 = vmatpush.msra.mxu0 %v466
    %489 = vmatmul.f32.gmra.mxu0 %v471
    %v490 = vpop.f32.mrf.mxu0
    %v491 = vadd.f32 0.0, %v490
    %492 = vdwg.mxu0
    %v494 = vsel %vm164, %v237, 0
    %496 = vmatpush.msra.mxu0 0.0
    %497 = vmatpush.msra.mxu0 0.0
    %498 = vmatpush.msra.mxu0 0.0
    %499 = vmatpush.msra.mxu0 0.0
    %500 = vmatpush.msra.mxu0 0.0
    %501 = vmatpush.msra.mxu0 0.0
    %502 = vmatpush.msra.mxu0 0.0
    %503 = vmatpush.msra.mxu0 0.0
    %504 = vmatpush.msra.mxu0 0.0
    %505 = vmatpush.msra.mxu0 0.0
    %506 = vmatpush.msra.mxu0 0.0
    %507 = vmatpush.msra.mxu0 0.0
    %508 = vmatpush.msra.mxu0 %v469
    %509 = vmatpush.msra.mxu0 %v468
    %510 = vmatpush.msra.mxu0 %v467
    %511 = vmatpush.msra.mxu0 %v466
    %512 = vmatmul.f32.gmra.mxu0 %v494
    %v513 = vpop.f32.mrf.mxu0
    %v514 = vadd.f32 0.0, %v513
    %515 = vdwg.mxu0
    %v517 = vsel %vm164, %v275, 0
    %519 = vmatpush.msra.mxu0 0.0
    %520 = vmatpush.msra.mxu0 0.0
    %521 = vmatpush.msra.mxu0 0.0
    %522 = vmatpush.msra.mxu0 0.0
    %523 = vmatpush.msra.mxu0 0.0
    %524 = vmatpush.msra.mxu0 0.0
    %525 = vmatpush.msra.mxu0 0.0
    %526 = vmatpush.msra.mxu0 0.0
    %527 = vmatpush.msra.mxu0 0.0
    %528 = vmatpush.msra.mxu0 0.0
    %529 = vmatpush.msra.mxu0 0.0
    %530 = vmatpush.msra.mxu0 0.0
    %531 = vmatpush.msra.mxu0 %v469
    %532 = vmatpush.msra.mxu0 %v468
    %533 = vmatpush.msra.mxu0 %v467
    %534 = vmatpush.msra.mxu0 %v466
    %535 = vmatmul.f32.gmra.mxu0 %v517
    %v536 = vpop.f32.mrf.mxu0
    %v537 = vadd.f32 0.0, %v536
    %538 = vdwg.mxu0
    %v540 = vsel %vm164, %v313, 0
    %542 = vmatpush.msra.mxu0 0.0
    %543 = vmatpush.msra.mxu0 0.0
    %544 = vmatpush.msra.mxu0 0.0
    %545 = vmatpush.msra.mxu0 0.0
    %546 = vmatpush.msra.mxu0 0.0
    %547 = vmatpush.msra.mxu0 0.0
    %548 = vmatpush.msra.mxu0 0.0
    %549 = vmatpush.msra.mxu0 0.0
    %550 = vmatpush.msra.mxu0 0.0
    %551 = vmatpush.msra.mxu0 0.0
    %552 = vmatpush.msra.mxu0 0.0
    %553 = vmatpush.msra.mxu0 0.0
    %554 = vmatpush.msra.mxu0 %v469
    %555 = vmatpush.msra.mxu0 %v468
    %556 = vmatpush.msra.mxu0 %v467
    %557 = vmatpush.msra.mxu0 %v466
    %558 = vmatmul.f32.gmra.mxu0 %v540
    %v559 = vpop.f32.mrf.mxu0
    %v560 = vadd.f32 0.0, %v559
    %561 = vdwg.mxu0
    %v563 = vsel %vm164, %v351, 0
    %565 = vmatpush.msra.mxu0 0.0
    %566 = vmatpush.msra.mxu0 0.0
    %567 = vmatpush.msra.mxu0 0.0
    %568 = vmatpush.msra.mxu0 0.0
    %569 = vmatpush.msra.mxu0 0.0
    %570 = vmatpush.msra.mxu0 0.0
    %571 = vmatpush.msra.mxu0 0.0
    %572 = vmatpush.msra.mxu0 0.0
    %573 = vmatpush.msra.mxu0 0.0
    %574 = vmatpush.msra.mxu0 0.0
    %575 = vmatpush.msra.mxu0 0.0
    %576 = vmatpush.msra.mxu0 0.0
    %577 = vmatpush.msra.mxu0 %v469
    %578 = vmatpush.msra.mxu0 %v468
    %579 = vmatpush.msra.mxu0 %v467
    %580 = vmatpush.msra.mxu0 %v466
    %581 = vmatmul.f32.gmra.mxu0 %v563
    %v582 = vpop.f32.mrf.mxu0
    %v583 = vadd.f32 0.0, %v582
    %584 = vdwg.mxu0
    %v586 = vsel %vm164, %v389, 0
    %588 = vmatpush.msra.mxu0 0.0
    %589 = vmatpush.msra.mxu0 0.0
    %590 = vmatpush.msra.mxu0 0.0
    %591 = vmatpush.msra.mxu0 0.0
    %592 = vmatpush.msra.mxu0 0.0
    %593 = vmatpush.msra.mxu0 0.0
    %594 = vmatpush.msra.mxu0 0.0
    %595 = vmatpush.msra.mxu0 0.0
    %596 = vmatpush.msra.mxu0 0.0
    %597 = vmatpush.msra.mxu0 0.0
    %598 = vmatpush.msra.mxu0 0.0
    %599 = vmatpush.msra.mxu0 0.0
    %600 = vmatpush.msra.mxu0 %v469
    %601 = vmatpush.msra.mxu0 %v468
    %602 = vmatpush.msra.mxu0 %v467
    %603 = vmatpush.msra.mxu0 %v466
    %604 = vmatmul.f32.gmra.mxu0 %v586
    %v605 = vpop.f32.mrf.mxu0
    %v606 = vadd.f32 0.0, %v605
    %607 = vdwg.mxu0
    %v609 = vsel %vm164, %v427, 0
    %611 = vmatpush.msra.mxu0 0.0
    %612 = vmatpush.msra.mxu0 0.0
    %613 = vmatpush.msra.mxu0 0.0
    %614 = vmatpush.msra.mxu0 0.0
    %615 = vmatpush.msra.mxu0 0.0
    %616 = vmatpush.msra.mxu0 0.0
    %617 = vmatpush.msra.mxu0 0.0
    %618 = vmatpush.msra.mxu0 0.0
    %619 = vmatpush.msra.mxu0 0.0
    %620 = vmatpush.msra.mxu0 0.0
    %621 = vmatpush.msra.mxu0 0.0
    %622 = vmatpush.msra.mxu0 0.0
    %623 = vmatpush.msra.mxu0 %v469
    %624 = vmatpush.msra.mxu0 %v468
    %625 = vmatpush.msra.mxu0 %v467
    %626 = vmatpush.msra.mxu0 %v466
    %627 = vmatmul.f32.gmra.mxu0 %v609
    %v628 = vpop.f32.mrf.mxu0
    %v629 = vadd.f32 0.0, %v628
    %630 = vdwg.mxu0
    %v632 = vsel %vm164, %v465, 0
    %634 = vmatpush.msra.mxu0 0.0
    %635 = vmatpush.msra.mxu0 0.0
    %636 = vmatpush.msra.mxu0 0.0
    %637 = vmatpush.msra.mxu0 0.0
    %638 = vmatpush.msra.mxu0 0.0
    %639 = vmatpush.msra.mxu0 0.0
    %640 = vmatpush.msra.mxu0 0.0
    %641 = vmatpush.msra.mxu0 0.0
    %642 = vmatpush.msra.mxu0 0.0
    %643 = vmatpush.msra.mxu0 0.0
    %644 = vmatpush.msra.mxu0 0.0
    %645 = vmatpush.msra.mxu0 0.0
    %646 = vmatpush.msra.mxu0 %v469
    %647 = vmatpush.msra.mxu0 %v468
    %648 = vmatpush.msra.mxu0 %v467
    %649 = vmatpush.msra.mxu0 %v466
    %650 = vmatmul.f32.gmra.mxu0 %v632
    %v651 = vpop.f32.mrf.mxu0
    %v652 = vadd.f32 0.0, %v651
    %653 = vdwg.mxu0
    %655 = vset.pattern.permute.xlu0 0
    %656 = vperm.xlu0 %655, %v151
    %v657 = vpop.permute.xlu0 %656
    %v659 = vmul.f32 %v657, %v491
    %660 = vset.pattern.permute.xlu0 1
    %661 = vperm.xlu0 %660, %v151
    %v662 = vpop.permute.xlu0 %661
    %v664 = vmul.f32 %v662, %v514
    %v665 = vadd.f32 %v659, %v664
    %666 = vset.pattern.permute.xlu0 2
    %667 = vperm.xlu0 %666, %v151
    %v668 = vpop.permute.xlu0 %667
    %v670 = vmul.f32 %v668, %v537
    %v671 = vadd.f32 %v665, %v670
    %672 = vset.pattern.permute.xlu0 3
    %673 = vperm.xlu0 %672, %v151
    %v674 = vpop.permute.xlu0 %673
    %v676 = vmul.f32 %v674, %v560
    %v677 = vadd.f32 %v671, %v676
    %678 = vset.pattern.permute.xlu0 4
    %679 = vperm.xlu0 %678, %v151
    %v680 = vpop.permute.xlu0 %679
    %v682 = vmul.f32 %v680, %v583
    %v683 = vadd.f32 %v677, %v682
    %684 = vset.pattern.permute.xlu0 5
    %685 = vperm.xlu0 %684, %v151
    %v686 = vpop.permute.xlu0 %685
    %v688 = vmul.f32 %v686, %v606
    %v689 = vadd.f32 %v683, %v688
    %690 = vset.pattern.permute.xlu0 6
    %691 = vperm.xlu0 %690, %v151
    %v692 = vpop.permute.xlu0 %691
    %v694 = vmul.f32 %v692, %v629
    %v695 = vadd.f32 %v689, %v694
    %696 = vset.pattern.permute.xlu0 7
    %697 = vperm.xlu0 %696, %v151
    %v698 = vpop.permute.xlu0 %697
    %v700 = vmul.f32 %v698, %v652
    %v701 = vadd.f32 %v695, %v700
    %v702 = vperm.slane %v153, 3
    %v703 = vadd.f32 %v701, %v702
    %v704 = vsel %vm164, %v703, 0.0
    %705 = vadd.xlane.f32.xlu0 %v704
    %v706 = vpop.xlane.xlu0 %705
    %v707 = vmul.f32 %v706, %v174
    %v708 = vsub.f32 %v703, %v707
    %v709 = vmul.f32 %v708, %v708
    %v710 = vsel %vm164, %v709, 0.0
    %711 = vadd.xlane.f32.xlu0 %v710
    %v712 = vpop.xlane.xlu0 %711
    %v713 = vmul.f32 %v712, %v174
    %v714 = vadd.f32 %v713, 1e-05
    %v715 = vrsqrt.pop %v714
    %v716 = vmul.f32 %v715, %v714
    %v717 = vmul.f32 %v716, %v715
    %v718 = vmul.f32 0.5, %v717
    %v719 = vsub.f32 1.5, %v718
    %v720 = vmul.f32 %v715, %v719
    %vm721 = vweird.f32 %v714
    %vm722 = vweird.f32 %v715
    %vm723 = vmor %vm721, %vm722
    %v724 = vsel %vm723, %v715, %v720
    %v725 = vmul.f32 %v708, %v724
    %v726 = vperm.slane %v153, 4
    %v727 = vmul.f32 %v725, %v726
    %v728 = vperm.slane %v153, 5
    %v729 = vadd.f32 %v727, %v728
    %v730 = vmax.f32 %v729, 0.0
    %731 = vset.pattern.permute.xlu0 8
    %732 = vperm.xlu0 %731, %v151
    %v733 = vpop.permute.xlu0 %732
    %v735 = vmul.f32 %v733, %v491
    %736 = vset.pattern.permute.xlu0 9
    %737 = vperm.xlu0 %736, %v151
    %v738 = vpop.permute.xlu0 %737
    %v740 = vmul.f32 %v738, %v514
    %v741 = vadd.f32 %v735, %v740
    %742 = vset.pattern.permute.xlu0 10
    %743 = vperm.xlu0 %742, %v151
    %v744 = vpop.permute.xlu0 %743
    %v746 = vmul.f32 %v744, %v537
    %v747 = vadd.f32 %v741, %v746
    %748 = vset.pattern.permute.xlu0 11
    %749 = vperm.xlu0 %748, %v151
    %v750 = vpop.permute.xlu0 %749
    %v752 = vmul.f32 %v750, %v560
    %v753 = vadd.f32 %v747, %v752
    %754 = vset.pattern.permute.xlu0 12
    %755 = vperm.xlu0 %754, %v151
    %v756 = vpop.permute.xlu0 %755
    %v758 = vmul.f32 %v756, %v583
    %v759 = vadd.f32 %v753, %v758
    %760 = vset.pattern.permute.xlu0 13
    %761 = vperm.xlu0 %760, %v151
    %v762 = vpop.permute.xlu0 %761
    %v764 = vmul.f32 %v762, %v606
    %v765 = vadd.f32 %v759, %v764
    %766 = vset.pattern.permute.xlu0 14
    %767 = vperm.xlu0 %766, %v151
    %v768 = vpop.permute.xlu0 %767
    %v770 = vmul.f32 %v768, %v629
    %v771 = vadd.f32 %v765, %v770
    %772 = vset.pattern.permute.xlu0 15
    %773 = vperm.xlu0 %772, %v151
    %v774 = vpop.permute.xlu0 %773
    %v776 = vmul.f32 %v774, %v652
    %v777 = vadd.f32 %v771, %v776
    %v778 = vadd.f32 %v777, %v702
    %v779 = vsel %vm164, %v778, 0.0
    %780 = vadd.xlane.f32.xlu0 %v779
    %v781 = vpop.xlane.xlu0 %780
    %v782 = vmul.f32 %v781, %v174
    %v783 = vsub.f32 %v778, %v782
    %v784 = vmul.f32 %v783, %v783
    %v785 = vsel %vm164, %v784, 0.0
    %786 = vadd.xlane.f32.xlu0 %v785
    %v787 = vpop.xlane.xlu0 %786
    %v788 = vmul.f32 %v787, %v174
    %v789 = vadd.f32 %v788, 1e-05
    %v790 = vrsqrt.pop %v789
    %v791 = vmul.f32 %v790, %v789
    %v792 = vmul.f32 %v791, %v790
    %v793 = vmul.f32 0.5, %v792
    %v794 = vsub.f32 1.5, %v793
    %v795 = vmul.f32 %v790, %v794
    %vm796 = vweird.f32 %v789
    %vm797 = vweird.f32 %v790
    %vm798 = vmor %vm796, %vm797
    %v799 = vsel %vm798, %v790, %v795
    %v800 = vmul.f32 %v783, %v799
    %v801 = vmul.f32 %v800, %v726
    %v802 = vadd.f32 %v801, %v728
    %v803 = vmax.f32 %v802, 0.0
    %804 = vset.pattern.permute.xlu0 16
    %805 = vperm.xlu0 %804, %v151
    %v806 = vpop.permute.xlu0 %805
    %v808 = vmul.f32 %v806, %v491
    %809 = vset.pattern.permute.xlu0 17
    %810 = vperm.xlu0 %809, %v151
    %v811 = vpop.permute.xlu0 %810
    %v813 = vmul.f32 %v811, %v514
    %v814 = vadd.f32 %v808, %v813
    %815 = vset.pattern.permute.xlu0 18
    %816 = vperm.xlu0 %815, %v151
    %v817 = vpop.permute.xlu0 %816
    %v819 = vmul.f32 %v817, %v537
    %v820 = vadd.f32 %v814, %v819
    %821 = vset.pattern.permute.xlu0 19
    %822 = vperm.xlu0 %821, %v151
    %v823 = vpop.permute.xlu0 %822
    %v825 = vmul.f32 %v823, %v560
    %v826 = vadd.f32 %v820, %v825
    %827 = vset.pattern.permute.xlu0 20
    %828 = vperm.xlu0 %827, %v151
    %v829 = vpop.permute.xlu0 %828
    %v831 = vmul.f32 %v829, %v583
    %v832 = vadd.f32 %v826, %v831
    %833 = vset.pattern.permute.xlu0 21
    %834 = vperm.xlu0 %833, %v151
    %v835 = vpop.permute.xlu0 %834
    %v837 = vmul.f32 %v835, %v606
    %v838 = vadd.f32 %v832, %v837
    %839 = vset.pattern.permute.xlu0 22
    %840 = vperm.xlu0 %839, %v151
    %v841 = vpop.permute.xlu0 %840
    %v843 = vmul.f32 %v841, %v629
    %v844 = vadd.f32 %v838, %v843
    %845 = vset.pattern.permute.xlu0 23
    %846 = vperm.xlu0 %845, %v151
    %v847 = vpop.permute.xlu0 %846
    %v849 = vmul.f32 %v847, %v652
    %v850 = vadd.f32 %v844, %v849
    %v851 = vadd.f32 %v850, %v702
    %v852 = vsel %vm164, %v851, 0.0
    %853 = vadd.xlane.f32.xlu0 %v852
    %v854 = vpop.xlane.xlu0 %853
    %v855 = vmul.f32 %v854, %v174
    %v856 = vsub.f32 %v851, %v855
    %v857 = vmul.f32 %v856, %v856
    %v858 = vsel %vm164, %v857, 0.0
    %859 = vadd.xlane.f32.xlu0 %v858
    %v860 = vpop.xlane.xlu0 %859
    %v861 = vmul.f32 %v860, %v174
    %v862 = vadd.f32 %v861, 1e-05
    %v863 = vrsqrt.pop %v862
    %v864 = vmul.f32 %v863, %v862
    %v865 = vmul.f32 %v864, %v863
    %v866 = vmul.f32 0.5, %v865
    %v867 = vsub.f32 1.5, %v866
    %v868 = vmul.f32 %v863, %v867
    %vm869 = vweird.f32 %v862
    %vm870 = vweird.f32 %v863
    %vm871 = vmor %vm869, %vm870
    %v872 = vsel %vm871, %v863, %v868
    %v873 = vmul.f32 %v856, %v872
    %v874 = vmul.f32 %v873, %v726
    %v875 = vadd.f32 %v874, %v728
    %v876 = vmax.f32 %v875, 0.0
    %877 = vset.pattern.permute.xlu0 24
    %878 = vperm.xlu0 %877, %v151
    %v879 = vpop.permute.xlu0 %878
    %v881 = vmul.f32 %v879, %v491
    %882 = vset.pattern.permute.xlu0 25
    %883 = vperm.xlu0 %882, %v151
    %v884 = vpop.permute.xlu0 %883
    %v886 = vmul.f32 %v884, %v514
    %v887 = vadd.f32 %v881, %v886
    %888 = vset.pattern.permute.xlu0 26
    %889 = vperm.xlu0 %888, %v151
    %v890 = vpop.permute.xlu0 %889
    %v892 = vmul.f32 %v890, %v537
    %v893 = vadd.f32 %v887, %v892
    %894 = vset.pattern.permute.xlu0 27
    %895 = vperm.xlu0 %894, %v151
    %v896 = vpop.permute.xlu0 %895
    %v898 = vmul.f32 %v896, %v560
    %v899 = vadd.f32 %v893, %v898
    %900 = vset.pattern.permute.xlu0 28
    %901 = vperm.xlu0 %900, %v151
    %v902 = vpop.permute.xlu0 %901
    %v904 = vmul.f32 %v902, %v583
    %v905 = vadd.f32 %v899, %v904
    %906 = vset.pattern.permute.xlu0 29
    %907 = vperm.xlu0 %906, %v151
    %v908 = vpop.permute.xlu0 %907
    %v910 = vmul.f32 %v908, %v606
    %v911 = vadd.f32 %v905, %v910
    %912 = vset.pattern.permute.xlu0 30
    %913 = vperm.xlu0 %912, %v151
    %v914 = vpop.permute.xlu0 %913
    %v916 = vmul.f32 %v914, %v629
    %v917 = vadd.f32 %v911, %v916
    %918 = vset.pattern.permute.xlu0 31
    %919 = vperm.xlu0 %918, %v151
    %v920 = vpop.permute.xlu0 %919
    %v922 = vmul.f32 %v920, %v652
    %v923 = vadd.f32 %v917, %v922
    %v924 = vadd.f32 %v923, %v702
    %v925 = vsel %vm164, %v924, 0.0
    %926 = vadd.xlane.f32.xlu0 %v925
    %v927 = vpop.xlane.xlu0 %926
    %v928 = vmul.f32 %v927, %v174
    %v929 = vsub.f32 %v924, %v928
    %v930 = vmul.f32 %v929, %v929
    %v931 = vsel %vm164, %v930, 0.0
    %932 = vadd.xlane.f32.xlu0 %v931
    %v933 = vpop.xlane.xlu0 %932
    %v934 = vmul.f32 %v933, %v174
    %v935 = vadd.f32 %v934, 1e-05
    %v936 = vrsqrt.pop %v935
    %v937 = vmul.f32 %v936, %v935
    %v938 = vmul.f32 %v937, %v936
    %v939 = vmul.f32 0.5, %v938
    %v940 = vsub.f32 1.5, %v939
    %v941 = vmul.f32 %v936, %v940
    %vm942 = vweird.f32 %v935
    %vm943 = vweird.f32 %v936
    %vm944 = vmor %vm942, %vm943
    %v945 = vsel %vm944, %v936, %v941
    %v946 = vmul.f32 %v929, %v945
    %v947 = vmul.f32 %v946, %v726
    %v948 = vadd.f32 %v947, %v728
    %v949 = vmax.f32 %v948, 0.0
    %950 = vset.pattern.permute.xlu0 32
    %951 = vperm.xlu0 %950, %v151
    %v952 = vpop.permute.xlu0 %951
    %v954 = vmul.f32 %v952, %v491
    %955 = vset.pattern.permute.xlu0 33
    %956 = vperm.xlu0 %955, %v151
    %v957 = vpop.permute.xlu0 %956
    %v959 = vmul.f32 %v957, %v514
    %v960 = vadd.f32 %v954, %v959
    %961 = vset.pattern.permute.xlu0 34
    %962 = vperm.xlu0 %961, %v151
    %v963 = vpop.permute.xlu0 %962
    %v965 = vmul.f32 %v963, %v537
    %v966 = vadd.f32 %v960, %v965
    %967 = vset.pattern.permute.xlu0 35
    %968 = vperm.xlu0 %967, %v151
    %v969 = vpop.permute.xlu0 %968
    %v971 = vmul.f32 %v969, %v560
    %v972 = vadd.f32 %v966, %v971
    %973 = vset.pattern.permute.xlu0 36
    %974 = vperm.xlu0 %973, %v151
    %v975 = vpop.permute.xlu0 %974
    %v977 = vmul.f32 %v975, %v583
    %v978 = vadd.f32 %v972, %v977
    %979 = vset.pattern.permute.xlu0 37
    %980 = vperm.xlu0 %979, %v151
    %v981 = vpop.permute.xlu0 %980
    %v983 = vmul.f32 %v981, %v606
    %v984 = vadd.f32 %v978, %v983
    %985 = vset.pattern.permute.xlu0 38
    %986 = vperm.xlu0 %985, %v151
    %v987 = vpop.permute.xlu0 %986
    %v989 = vmul.f32 %v987, %v629
    %v990 = vadd.f32 %v984, %v989
    %991 = vset.pattern.permute.xlu0 39
    %992 = vperm.xlu0 %991, %v151
    %v993 = vpop.permute.xlu0 %992
    %v995 = vmul.f32 %v993, %v652
    %v996 = vadd.f32 %v990, %v995
    %v997 = vadd.f32 %v996, %v702
    %v998 = vsel %vm164, %v997, 0.0
    %999 = vadd.xlane.f32.xlu0 %v998
    %v1000 = vpop.xlane.xlu0 %999
    %v1001 = vmul.f32 %v1000, %v174
    %v1002 = vsub.f32 %v997, %v1001
    %v1003 = vmul.f32 %v1002, %v1002
    %v1004 = vsel %vm164, %v1003, 0.0
    %1005 = vadd.xlane.f32.xlu0 %v1004
    %v1006 = vpop.xlane.xlu0 %1005
    %v1007 = vmul.f32 %v1006, %v174
    %v1008 = vadd.f32 %v1007, 1e-05
    %v1009 = vrsqrt.pop %v1008
    %v1010 = vmul.f32 %v1009, %v1008
    %v1011 = vmul.f32 %v1010, %v1009
    %v1012 = vmul.f32 0.5, %v1011
    %v1013 = vsub.f32 1.5, %v1012
    %v1014 = vmul.f32 %v1009, %v1013
    %vm1015 = vweird.f32 %v1008
    %vm1016 = vweird.f32 %v1009
    %vm1017 = vmor %vm1015, %vm1016
    %v1018 = vsel %vm1017, %v1009, %v1014
    %v1019 = vmul.f32 %v1002, %v1018
    %v1020 = vmul.f32 %v1019, %v726
    %v1021 = vadd.f32 %v1020, %v728
    %v1022 = vmax.f32 %v1021, 0.0
    %1023 = vset.pattern.permute.xlu0 40
    %1024 = vperm.xlu0 %1023, %v151
    %v1025 = vpop.permute.xlu0 %1024
    %v1027 = vmul.f32 %v1025, %v491
    %1028 = vset.pattern.permute.xlu0 41
    %1029 = vperm.xlu0 %1028, %v151
    %v1030 = vpop.permute.xlu0 %1029
    %v1032 = vmul.f32 %v1030, %v514
    %v1033 = vadd.f32 %v1027, %v1032
    %1034 = vset.pattern.permute.xlu0 42
    %1035 = vperm.xlu0 %1034, %v151
    %v1036 = vpop.permute.xlu0 %1035
    %v1038 = vmul.f32 %v1036, %v537
    %v1039 = vadd.f32 %v1033, %v1038
    %1040 = vset.pattern.permute.xlu0 43
    %1041 = vperm.xlu0 %1040, %v151
    %v1042 = vpop.permute.xlu0 %1041
    %v1044 = vmul.f32 %v1042, %v560
    %v1045 = vadd.f32 %v1039, %v1044
    %1046 = vset.pattern.permute.xlu0 44
    %1047 = vperm.xlu0 %1046, %v151
    %v1048 = vpop.permute.xlu0 %1047
    %v1050 = vmul.f32 %v1048, %v583
    %v1051 = vadd.f32 %v1045, %v1050
    %1052 = vset.pattern.permute.xlu0 45
    %1053 = vperm.xlu0 %1052, %v151
    %v1054 = vpop.permute.xlu0 %1053
    %v1056 = vmul.f32 %v1054, %v606
    %v1057 = vadd.f32 %v1051, %v1056
    %1058 = vset.pattern.permute.xlu0 46
    %1059 = vperm.xlu0 %1058, %v151
    %v1060 = vpop.permute.xlu0 %1059
    %v1062 = vmul.f32 %v1060, %v629
    %v1063 = vadd.f32 %v1057, %v1062
    %1064 = vset.pattern.permute.xlu0 47
    %1065 = vperm.xlu0 %1064, %v151
    %v1066 = vpop.permute.xlu0 %1065
    %v1068 = vmul.f32 %v1066, %v652
    %v1069 = vadd.f32 %v1063, %v1068
    %v1070 = vadd.f32 %v1069, %v702
    %v1071 = vsel %vm164, %v1070, 0.0
    %1072 = vadd.xlane.f32.xlu0 %v1071
    %v1073 = vpop.xlane.xlu0 %1072
    %v1074 = vmul.f32 %v1073, %v174
    %v1075 = vsub.f32 %v1070, %v1074
    %v1076 = vmul.f32 %v1075, %v1075
    %v1077 = vsel %vm164, %v1076, 0.0
    %1078 = vadd.xlane.f32.xlu0 %v1077
    %v1079 = vpop.xlane.xlu0 %1078
    %v1080 = vmul.f32 %v1079, %v174
    %v1081 = vadd.f32 %v1080, 1e-05
    %v1082 = vrsqrt.pop %v1081
    %v1083 = vmul.f32 %v1082, %v1081
    %v1084 = vmul.f32 %v1083, %v1082
    %v1085 = vmul.f32 0.5, %v1084
    %v1086 = vsub.f32 1.5, %v1085
    %v1087 = vmul.f32 %v1082, %v1086
    %vm1088 = vweird.f32 %v1081
    %vm1089 = vweird.f32 %v1082
    %vm1090 = vmor %vm1088, %vm1089
    %v1091 = vsel %vm1090, %v1082, %v1087
    %v1092 = vmul.f32 %v1075, %v1091
    %v1093 = vmul.f32 %v1092, %v726
    %v1094 = vadd.f32 %v1093, %v728
    %v1095 = vmax.f32 %v1094, 0.0
    %1096 = vset.pattern.permute.xlu0 48
    %1097 = vperm.xlu0 %1096, %v151
    %v1098 = vpop.permute.xlu0 %1097
    %v1100 = vmul.f32 %v1098, %v491
    %1101 = vset.pattern.permute.xlu0 49
    %1102 = vperm.xlu0 %1101, %v151
    %v1103 = vpop.permute.xlu0 %1102
    %v1105 = vmul.f32 %v1103, %v514
    %v1106 = vadd.f32 %v1100, %v1105
    %1107 = vset.pattern.permute.xlu0 50
    %1108 = vperm.xlu0 %1107, %v151
    %v1109 = vpop.permute.xlu0 %1108
    %v1111 = vmul.f32 %v1109, %v537
    %v1112 = vadd.f32 %v1106, %v1111
    %1113 = vset.pattern.permute.xlu0 51
    %1114 = vperm.xlu0 %1113, %v151
    %v1115 = vpop.permute.xlu0 %1114
    %v1117 = vmul.f32 %v1115, %v560
    %v1118 = vadd.f32 %v1112, %v1117
    %1119 = vset.pattern.permute.xlu0 52
    %1120 = vperm.xlu0 %1119, %v151
    %v1121 = vpop.permute.xlu0 %1120
    %v1123 = vmul.f32 %v1121, %v583
    %v1124 = vadd.f32 %v1118, %v1123
    %1125 = vset.pattern.permute.xlu0 53
    %1126 = vperm.xlu0 %1125, %v151
    %v1127 = vpop.permute.xlu0 %1126
    %v1129 = vmul.f32 %v1127, %v606
    %v1130 = vadd.f32 %v1124, %v1129
    %1131 = vset.pattern.permute.xlu0 54
    %1132 = vperm.xlu0 %1131, %v151
    %v1133 = vpop.permute.xlu0 %1132
    %v1135 = vmul.f32 %v1133, %v629
    %v1136 = vadd.f32 %v1130, %v1135
    %1137 = vset.pattern.permute.xlu0 55
    %1138 = vperm.xlu0 %1137, %v151
    %v1139 = vpop.permute.xlu0 %1138
    %v1141 = vmul.f32 %v1139, %v652
    %v1142 = vadd.f32 %v1136, %v1141
    %v1143 = vadd.f32 %v1142, %v702
    %v1144 = vsel %vm164, %v1143, 0.0
    %1145 = vadd.xlane.f32.xlu0 %v1144
    %v1146 = vpop.xlane.xlu0 %1145
    %v1147 = vmul.f32 %v1146, %v174
    %v1148 = vsub.f32 %v1143, %v1147
    %v1149 = vmul.f32 %v1148, %v1148
    %v1150 = vsel %vm164, %v1149, 0.0
    %1151 = vadd.xlane.f32.xlu0 %v1150
    %v1152 = vpop.xlane.xlu0 %1151
    %v1153 = vmul.f32 %v1152, %v174
    %v1154 = vadd.f32 %v1153, 1e-05
    %v1155 = vrsqrt.pop %v1154
    %v1156 = vmul.f32 %v1155, %v1154
    %v1157 = vmul.f32 %v1156, %v1155
    %v1158 = vmul.f32 0.5, %v1157
    %v1159 = vsub.f32 1.5, %v1158
    %v1160 = vmul.f32 %v1155, %v1159
    %vm1161 = vweird.f32 %v1154
    %vm1162 = vweird.f32 %v1155
    %vm1163 = vmor %vm1161, %vm1162
    %v1164 = vsel %vm1163, %v1155, %v1160
    %v1165 = vmul.f32 %v1148, %v1164
    %v1166 = vmul.f32 %v1165, %v726
    %v1167 = vadd.f32 %v1166, %v728
    %v1168 = vmax.f32 %v1167, 0.0
    %1169 = vset.pattern.permute.xlu0 56
    %1170 = vperm.xlu0 %1169, %v151
    %v1171 = vpop.permute.xlu0 %1170
    %v1173 = vmul.f32 %v1171, %v491
    %1174 = vset.pattern.permute.xlu0 57
    %1175 = vperm.xlu0 %1174, %v151
    %v1176 = vpop.permute.xlu0 %1175
    %v1178 = vmul.f32 %v1176, %v514
    %v1179 = vadd.f32 %v1173, %v1178
    %1180 = vset.pattern.permute.xlu0 58
    %1181 = vperm.xlu0 %1180, %v151
    %v1182 = vpop.permute.xlu0 %1181
    %v1184 = vmul.f32 %v1182, %v537
    %v1185 = vadd.f32 %v1179, %v1184
    %1186 = vset.pattern.permute.xlu0 59
    %1187 = vperm.xlu0 %1186, %v151
    %v1188 = vpop.permute.xlu0 %1187
    %v1190 = vmul.f32 %v1188, %v560
    %v1191 = vadd.f32 %v1185, %v1190
    %1192 = vset.pattern.permute.xlu0 60
    %1193 = vperm.xlu0 %1192, %v151
    %v1194 = vpop.permute.xlu0 %1193
    %v1196 = vmul.f32 %v1194, %v583
    %v1197 = vadd.f32 %v1191, %v1196
    %1198 = vset.pattern.permute.xlu0 61
    %1199 = vperm.xlu0 %1198, %v151
    %v1200 = vpop.permute.xlu0 %1199
    %v1202 = vmul.f32 %v1200, %v606
    %v1203 = vadd.f32 %v1197, %v1202
    %1204 = vset.pattern.permute.xlu0 62
    %1205 = vperm.xlu0 %1204, %v151
    %v1206 = vpop.permute.xlu0 %1205
    %v1208 = vmul.f32 %v1206, %v629
    %v1209 = vadd.f32 %v1203, %v1208
    %1210 = vset.pattern.permute.xlu0 63
    %1211 = vperm.xlu0 %1210, %v151
    %v1212 = vpop.permute.xlu0 %1211
    %v1214 = vmul.f32 %v1212, %v652
    %v1215 = vadd.f32 %v1209, %v1214
    %v1216 = vadd.f32 %v1215, %v702
    %v1217 = vsel %vm164, %v1216, 0.0
    %1218 = vadd.xlane.f32.xlu0 %v1217
    %v1219 = vpop.xlane.xlu0 %1218
    %v1220 = vmul.f32 %v1219, %v174
    %v1221 = vsub.f32 %v1216, %v1220
    %v1222 = vmul.f32 %v1221, %v1221
    %v1223 = vsel %vm164, %v1222, 0.0
    %1224 = vadd.xlane.f32.xlu0 %v1223
    %v1225 = vpop.xlane.xlu0 %1224
    %v1226 = vmul.f32 %v1225, %v174
    %v1227 = vadd.f32 %v1226, 1e-05
    %v1228 = vrsqrt.pop %v1227
    %v1229 = vmul.f32 %v1228, %v1227
    %v1230 = vmul.f32 %v1229, %v1228
    %v1231 = vmul.f32 0.5, %v1230
    %v1232 = vsub.f32 1.5, %v1231
    %v1233 = vmul.f32 %v1228, %v1232
    %vm1234 = vweird.f32 %v1227
    %vm1235 = vweird.f32 %v1228
    %vm1236 = vmor %vm1234, %vm1235
    %v1237 = vsel %vm1236, %v1228, %v1233
    %v1238 = vmul.f32 %v1221, %v1237
    %v1239 = vmul.f32 %v1238, %v726
    %v1240 = vadd.f32 %v1239, %v728
    %v1241 = vmax.f32 %v1240, 0.0
    %v1242 = vld [vmem:[#allocation10] sm:$0xff]
    %v1243 = vld [vmem:[#allocation10 + $0x8] sm:$0xff]
    %v1244 = vld [vmem:[#allocation10 + $0x10] sm:$0xff]
    %v1245 = vld [vmem:[#allocation10 + $0x18] sm:$0xff]
    %s1246 = scalar_lea.vmem [#allocation10], 32
    %v1247 = vld [vmem:[%s1246] sm:$0xff]
    %v1248 = vld [vmem:[%s1246 + $0x8] sm:$0xff]
    %v1249 = vld [vmem:[%s1246 + $0x10] sm:$0xff]
    %v1250 = vld [vmem:[%s1246 + $0x18] sm:$0xff]
    %v1252 = vsel %vm164, %v803, 0
    %1254 = vmatpush.msra.mxu0 0.0
    %1255 = vmatpush.msra.mxu0 0.0
    %1256 = vmatpush.msra.mxu0 0.0
    %1257 = vmatpush.msra.mxu0 0.0
    %1258 = vmatpush.msra.mxu0 0.0
    %1259 = vmatpush.msra.mxu0 0.0
    %1260 = vmatpush.msra.mxu0 0.0
    %1261 = vmatpush.msra.mxu0 0.0
    %1262 = vmatpush.msra.mxu0 0.0
    %1263 = vmatpush.msra.mxu0 0.0
    %1264 = vmatpush.msra.mxu0 0.0
    %1265 = vmatpush.msra.mxu0 0.0
    %1266 = vmatpush.msra.mxu0 %v1250
    %1267 = vmatpush.msra.mxu0 %v1249
    %1268 = vmatpush.msra.mxu0 %v1248
    %1269 = vmatpush.msra.mxu0 %v1247
    %1270 = vmatmul.f32.gmra.mxu0 %v1252
    %v1271 = vpop.f32.mrf.mxu0
    %v1272 = vadd.f32 0.0, %v1271
    %1273 = vdwg.mxu0
    %v1275 = vsel %vm164, %v730, 0
    %1277 = vmatpush.msra.mxu0 0.0
    %1278 = vmatpush.msra.mxu0 0.0
    %1279 = vmatpush.msra.mxu0 0.0
    %1280 = vmatpush.msra.mxu0 0.0
    %1281 = vmatpush.msra.mxu0 0.0
    %1282 = vmatpush.msra.mxu0 0.0
    %1283 = vmatpush.msra.mxu0 0.0
    %1284 = vmatpush.msra.mxu0 0.0
    %1285 = vmatpush.msra.mxu0 0.0
    %1286 = vmatpush.msra.mxu0 0.0
    %1287 = vmatpush.msra.mxu0 0.0
    %1288 = vmatpush.msra.mxu0 0.0
    %1289 = vmatpush.msra.mxu0 %v1245
    %1290 = vmatpush.msra.mxu0 %v1244
    %1291 = vmatpush.msra.mxu0 %v1243
    %1292 = vmatpush.msra.mxu0 %v1242
    %1293 = vmatmul.f32.gmra.mxu0 %v1275
    %v1294 = vpop.f32.mrf.mxu0
    %v1295 = vadd.f32 %v1272, %v1294
    %1296 = vdwg.mxu0
    %s1297 = scalar_lea.vmem [#allocation10], 64
    %v1298 = vld [vmem:[%s1297] sm:$0xff]
    %v1299 = vld [vmem:[%s1297 + $0x8] sm:$0xff]
    %v1300 = vld [vmem:[%s1297 + $0x10] sm:$0xff]
    %v1301 = vld [vmem:[%s1297 + $0x18] sm:$0xff]
    %v1303 = vsel %vm164, %v876, 0
    %1305 = vmatpush.msra.mxu0 0.0
    %1306 = vmatpush.msra.mxu0 0.0
    %1307 = vmatpush.msra.mxu0 0.0
    %1308 = vmatpush.msra.mxu0 0.0
    %1309 = vmatpush.msra.mxu0 0.0
    %1310 = vmatpush.msra.mxu0 0.0
    %1311 = vmatpush.msra.mxu0 0.0
    %1312 = vmatpush.msra.mxu0 0.0
    %1313 = vmatpush.msra.mxu0 0.0
    %1314 = vmatpush.msra.mxu0 0.0
    %1315 = vmatpush.msra.mxu0 0.0
    %1316 = vmatpush.msra.mxu0 0.0
    %1317 = vmatpush.msra.mxu0 %v1301
    %1318 = vmatpush.msra.mxu0 %v1300
    %1319 = vmatpush.msra.mxu0 %v1299
    %1320 = vmatpush.msra.mxu0 %v1298
    %1321 = vmatmul.f32.gmra.mxu0 %v1303
    %v1322 = vpop.f32.mrf.mxu0
    %v1323 = vadd.f32 0.0, %v1322
    %1324 = vdwg.mxu0
    %v1325 = vadd.f32 %v1295, %v1323
    %s1326 = scalar_lea.vmem [#allocation10], 96
    %v1327 = vld [vmem:[%s1326] sm:$0xff]
    %v1328 = vld [vmem:[%s1326 + $0x8] sm:$0xff]
    %v1329 = vld [vmem:[%s1326 + $0x10] sm:$0xff]
    %v1330 = vld [vmem:[%s1326 + $0x18] sm:$0xff]
    %v1332 = vsel %vm164, %v949, 0
    %1334 = vmatpush.msra.mxu0 0.0
    %1335 = vmatpush.msra.mxu0 0.0
    %1336 = vmatpush.msra.mxu0 0.0
    %1337 = vmatpush.msra.mxu0 0.0
    %1338 = vmatpush.msra.mxu0 0.0
    %1339 = vmatpush.msra.mxu0 0.0
    %1340 = vmatpush.msra.mxu0 0.0
    %1341 = vmatpush.msra.mxu0 0.0
    %1342 = vmatpush.msra.mxu0 0.0
    %1343 = vmatpush.msra.mxu0 0.0
    %1344 = vmatpush.msra.mxu0 0.0
    %1345 = vmatpush.msra.mxu0 0.0
    %1346 = vmatpush.msra.mxu0 %v1330
    %1347 = vmatpush.msra.mxu0 %v1329
    %1348 = vmatpush.msra.mxu0 %v1328
    %1349 = vmatpush.msra.mxu0 %v1327
    %1350 = vmatmul.f32.gmra.mxu0 %v1332
    %v1351 = vpop.f32.mrf.mxu0
    %v1352 = vadd.f32 0.0, %v1351
    %1353 = vdwg.mxu0
    %v1354 = vadd.f32 %v1325, %v1352
    %s1355 = scalar_lea.vmem [#allocation10], 128
    %v1356 = vld [vmem:[%s1355] sm:$0xff]
    %v1357 = vld [vmem:[%s1355 + $0x8] sm:$0xff]
    %v1358 = vld [vmem:[%s1355 + $0x10] sm:$0xff]
    %v1359 = vld [vmem:[%s1355 + $0x18] sm:$0xff]
    %v1361 = vsel %vm164, %v1022, 0
    %1363 = vmatpush.msra.mxu0 0.0
    %1364 = vmatpush.msra.mxu0 0.0
    %1365 = vmatpush.msra.mxu0 0.0
    %1366 = vmatpush.msra.mxu0 0.0
    %1367 = vmatpush.msra.mxu0 0.0
    %1368 = vmatpush.msra.mxu0 0.0
    %1369 = vmatpush.msra.mxu0 0.0
    %1370 = vmatpush.msra.mxu0 0.0
    %1371 = vmatpush.msra.mxu0 0.0
    %1372 = vmatpush.msra.mxu0 0.0
    %1373 = vmatpush.msra.mxu0 0.0
    %1374 = vmatpush.msra.mxu0 0.0
    %1375 = vmatpush.msra.mxu0 %v1359
    %1376 = vmatpush.msra.mxu0 %v1358
    %1377 = vmatpush.msra.mxu0 %v1357
    %1378 = vmatpush.msra.mxu0 %v1356
    %1379 = vmatmul.f32.gmra.mxu0 %v1361
    %v1380 = vpop.f32.mrf.mxu0
    %v1381 = vadd.f32 0.0, %v1380
    %1382 = vdwg.mxu0
    %v1383 = vadd.f32 %v1354, %v1381
    %s1384 = scalar_lea.vmem [#allocation10], 160
    %v1385 = vld [vmem:[%s1384] sm:$0xff]
    %v1386 = vld [vmem:[%s1384 + $0x8] sm:$0xff]
    %v1387 = vld [vmem:[%s1384 + $0x10] sm:$0xff]
    %v1388 = vld [vmem:[%s1384 + $0x18] sm:$0xff]
    %v1390 = vsel %vm164, %v1095, 0
    %1392 = vmatpush.msra.mxu0 0.0
    %1393 = vmatpush.msra.mxu0 0.0
    %1394 = vmatpush.msra.mxu0 0.0
    %1395 = vmatpush.msra.mxu0 0.0
    %1396 = vmatpush.msra.mxu0 0.0
    %1397 = vmatpush.msra.mxu0 0.0
    %1398 = vmatpush.msra.mxu0 0.0
    %1399 = vmatpush.msra.mxu0 0.0
    %1400 = vmatpush.msra.mxu0 0.0
    %1401 = vmatpush.msra.mxu0 0.0
    %1402 = vmatpush.msra.mxu0 0.0
    %1403 = vmatpush.msra.mxu0 0.0
    %1404 = vmatpush.msra.mxu0 %v1388
    %1405 = vmatpush.msra.mxu0 %v1387
    %1406 = vmatpush.msra.mxu0 %v1386
    %1407 = vmatpush.msra.mxu0 %v1385
    %1408 = vmatmul.f32.gmra.mxu0 %v1390
    %v1409 = vpop.f32.mrf.mxu0
    %v1410 = vadd.f32 0.0, %v1409
    %1411 = vdwg.mxu0
    %v1412 = vadd.f32 %v1383, %v1410
    %s1413 = scalar_lea.vmem [#allocation10], 192
    %v1414 = vld [vmem:[%s1413] sm:$0xff]
    %v1415 = vld [vmem:[%s1413 + $0x8] sm:$0xff]
    %v1416 = vld [vmem:[%s1413 + $0x10] sm:$0xff]
    %v1417 = vld [vmem:[%s1413 + $0x18] sm:$0xff]
    %v1419 = vsel %vm164, %v1168, 0
    %1421 = vmatpush.msra.mxu0 0.0
    %1422 = vmatpush.msra.mxu0 0.0
    %1423 = vmatpush.msra.mxu0 0.0
    %1424 = vmatpush.msra.mxu0 0.0
    %1425 = vmatpush.msra.mxu0 0.0
    %1426 = vmatpush.msra.mxu0 0.0
    %1427 = vmatpush.msra.mxu0 0.0
    %1428 = vmatpush.msra.mxu0 0.0
    %1429 = vmatpush.msra.mxu0 0.0
    %1430 = vmatpush.msra.mxu0 0.0
    %1431 = vmatpush.msra.mxu0 0.0
    %1432 = vmatpush.msra.mxu0 0.0
    %1433 = vmatpush.msra.mxu0 %v1417
    %1434 = vmatpush.msra.mxu0 %v1416
    %1435 = vmatpush.msra.mxu0 %v1415
    %1436 = vmatpush.msra.mxu0 %v1414
    %1437 = vmatmul.f32.gmra.mxu0 %v1419
    %v1438 = vpop.f32.mrf.mxu0
    %v1439 = vadd.f32 0.0, %v1438
    %1440 = vdwg.mxu0
    %v1441 = vadd.f32 %v1412, %v1439
    %s1442 = scalar_lea.vmem [#allocation10], 224
    %v1443 = vld [vmem:[%s1442] sm:$0xff]
    %v1444 = vld [vmem:[%s1442 + $0x8] sm:$0xff]
    %v1445 = vld [vmem:[%s1442 + $0x10] sm:$0xff]
    %v1446 = vld [vmem:[%s1442 + $0x18] sm:$0xff]
    %v1448 = vsel %vm164, %v1241, 0
    %1450 = vmatpush.msra.mxu0 0.0
    %1451 = vmatpush.msra.mxu0 0.0
    %1452 = vmatpush.msra.mxu0 0.0
    %1453 = vmatpush.msra.mxu0 0.0
    %1454 = vmatpush.msra.mxu0 0.0
    %1455 = vmatpush.msra.mxu0 0.0
    %1456 = vmatpush.msra.mxu0 0.0
    %1457 = vmatpush.msra.mxu0 0.0
    %1458 = vmatpush.msra.mxu0 0.0
    %1459 = vmatpush.msra.mxu0 0.0
    %1460 = vmatpush.msra.mxu0 0.0
    %1461 = vmatpush.msra.mxu0 0.0
    %1462 = vmatpush.msra.mxu0 %v1446
    %1463 = vmatpush.msra.mxu0 %v1445
    %1464 = vmatpush.msra.mxu0 %v1444
    %1465 = vmatpush.msra.mxu0 %v1443
    %1466 = vmatmul.f32.gmra.mxu0 %v1448
    %v1467 = vpop.f32.mrf.mxu0
    %v1468 = vadd.f32 0.0, %v1467
    %1469 = vdwg.mxu0
    %v1470 = vadd.f32 %v1441, %v1468
    %v1471 = vperm.slane %v154, 0
    %v1472 = vadd.f32 %v1470, %v1471
    %v1473 = vld [vmem:[#allocation11] sm:$0xff]
    %v1474 = vld [vmem:[#allocation11 + $0x8] sm:$0xff]
    %v1475 = vperm.slane %v153, 7
    %vm1476 = vcmask 130048
    %v1478 = vsel %vm1476, %v1472, 0
    %1480 = vmatpush.msra.mxu0 0.0
    %1481 = vmatpush.msra.mxu0 0.0
    %1482 = vmatpush.msra.mxu0 0.0
    %1483 = vmatpush.msra.mxu0 0.0
    %1484 = vmatpush.msra.mxu0 0.0
    %1485 = vmatpush.msra.mxu0 0.0
    %1486 = vmatpush.msra.mxu0 0.0
    %1487 = vmatpush.msra.mxu0 0.0
    %1488 = vmatpush.msra.mxu0 0.0
    %1489 = vmatpush.msra.mxu0 0.0
    %1490 = vmatpush.msra.mxu0 0.0
    %1491 = vmatpush.msra.mxu0 0.0
    %1492 = vmatpush.msra.mxu0 0.0
    %1493 = vmatpush.msra.mxu0 0.0
    %1494 = vmatpush.msra.mxu0 %v1474
    %1495 = vmatpush.msra.mxu0 %v1473
    %1496 = vmatmul.f32.gmra.mxu0 %v1478
    %v1497 = vpop.f32.mrf.mxu0
    %v1498 = vadd.f32 %v1475, %v1497
    %1499 = vdwg.mxu0
    %v1500 = vmax.f32 %v1498, 0.0
    %v1501 = vld [vmem:[#allocation13] sm:$0xff]
    %v1502 = vld [vmem:[#allocation13 + $0x8] sm:$0xff]
    %v1503 = vperm.slane %v154, 1
    %v1505 = vsel %vm1476, %v1500, 0
    %1507 = vmatpush.msra.mxu0 0.0
    %1508 = vmatpush.msra.mxu0 0.0
    %1509 = vmatpush.msra.mxu0 0.0
    %1510 = vmatpush.msra.mxu0 0.0
    %1511 = vmatpush.msra.mxu0 0.0
    %1512 = vmatpush.msra.mxu0 0.0
    %1513 = vmatpush.msra.mxu0 0.0
    %1514 = vmatpush.msra.mxu0 0.0
    %1515 = vmatpush.msra.mxu0 0.0
    %1516 = vmatpush.msra.mxu0 0.0
    %1517 = vmatpush.msra.mxu0 0.0
    %1518 = vmatpush.msra.mxu0 0.0
    %1519 = vmatpush.msra.mxu0 0.0
    %1520 = vmatpush.msra.mxu0 0.0
    %1521 = vmatpush.msra.mxu0 %v1502
    %1522 = vmatpush.msra.mxu0 %v1501
    %1523 = vmatmul.f32.gmra.mxu0 %v1505
    %v1524 = vpop.f32.mrf.mxu0
    %v1525 = vadd.f32 %v1503, %v1524
    %1526 = vdwg.mxu0
    %v1527 = vmax.f32 %v1525, 0.0
    %v1528 = vld [vmem:[#allocation14] sm:$0xff]
    %v1529 = vld [vmem:[#allocation14 + $0x8] sm:$0xff]
    %v1530 = vmul.f32 %v1472, %v1472
    %v1531 = vsel %vm1476, %v1530, 0.0
    %1532 = vadd.xlane.f32.xlu0 %v1531
    %v1533 = vpop.xlane.xlu0 %1532
    %v1534 = vmul.f32 %v1528, %v1528
    %v1535 = vmul.f32 %v1529, %v1529
    %vm1536 = vcmask 523264
    %v1537 = vsel %vm1536, %v1534, 0.0
    %v1538 = vsel %vm1536, %v1535, 0.0
    %v1539 = vadd.f32 %v1537, %v1538
    %v1540 = vrot.slane %v1539, 4
    %v1541 = vadd.f32 %v1539, %v1540
    %v1542 = vrot.slane %v1541, 2
    %v1543 = vadd.f32 %v1541, %v1542
    %v1544 = vrot.slane %v1543, 1
    %v1545 = vadd.f32 %v1543, %v1544
    %v1546 = vadd.f32 %v1533, %v1545
    %1547 = vmatpush.msra.mxu0 0.0
    %1548 = vmatpush.msra.mxu0 0.0
    %1549 = vmatpush.msra.mxu0 0.0
    %1550 = vmatpush.msra.mxu0 0.0
    %1551 = vmatpush.msra.mxu0 0.0
    %1552 = vmatpush.msra.mxu0 0.0
    %1553 = vmatpush.msra.mxu0 0.0
    %1554 = vmatpush.msra.mxu0 0.0
    %1555 = vmatpush.msra.mxu0 0.0
    %1556 = vmatpush.msra.mxu0 0.0
    %1557 = vmatpush.msra.mxu0 0.0
    %1558 = vmatpush.msra.mxu0 0.0
    %1559 = vmatpush.msra.mxu0 0.0
    %1560 = vmatpush.msra.mxu0 0.0
    %1561 = vmatpush.msra.mxu0 %v1529
    %1562 = vmatpush.msra.mxu0 %v1528
    %1563 = vmatmul.f32.gmra.mxu0 %v1478
    %v1564 = vpop.f32.mrf.mxu0
    %v1565 = vadd.f32 0.0, %v1564
    %1566 = vdwg.mxu0
    %v1567 = vmul.f32 %v1565, 2.0
    %v1568 = vsub.f32 %v1546, %v1567
    %v1569 = vsel %vm1536, %v1568, inf
    %1570 = vmin.xlane.f32.xlu0 %v1569
    %v1571 = vpop.xlane.xlu0 %1570
    %v1572 = vlaneseq
    %v1573 = vand.u32 %v1572, 127
    %vm1574 = vcmp.eq.f32.partialorder %v1568, %v1571
    %v1575 = vsel %vm1574, %v1573, 64
    %v1576 = vsel %vm1536, %v1575, 2147483647
    %v1577 = vand.u32 %v1576, 65535
    %v1578 = vshra.s32 %v1576, 16
    %v1579 = vcvt.s32.f32 %v1577
    %v1580 = vcvt.s32.f32 %v1578
    %1581 = vmin.xlane.f32.xlu0 %v1580
    %v1582 = vpop.xlane.xlu0 %1581
    %vm1583 = vcmp.eq.f32.partialorder %v1580, %v1582
    %v1584 = vsel %vm1583, %v1579, inf
    %1585 = vmin.xlane.f32.xlu0 %v1584
    %v1586 = vpop.xlane.xlu0 %1585
    %v1587 = vcvt.f32.s32 %v1586
    %v1588 = vcvt.f32.s32 %v1582
    %v1589 = vshll.u32 %v1588, 16
    %v1590 = vadd.s32 %v1589, %v1587
    %vm1591 = vcmp.eq.s32.totalorder %v1573, 19
    %v1592 = vcvt.s32.f32 %v1590
    %v1593 = vsel %vm1591, %v1592, 0.0
    %v1594 = vadd.f32 %v1472, %v1527
    %v1595 = vadd.f32 %v1594, %v1593
    %1596 = vst.msk [vmem:[#allocation16] sm:$0xff] %vm164, %v1595
    // Predicated region
    $region66: #{tpu_custom_call.1} parent=1 // pred_check
      _
    $region67: #{tpu_custom_call.1} parent=1 // pred_check_branch
      %1598 = sbr.rel (0) target = $region69
    $region68: #{tpu_custom_call.1} parent=1 // pred_region
      %1600 = vsyncadd [#allocation4], 0
      %s1602 = sshll.u32 [#allocation16], 4
      %s1603 = int_to_ptr.vmem [resolvable:$true] %s1602
      %s1604 = sshll.u32 %s8, 4
      %s1605 = int_to_ptr.hbm [resolvable:$true] %s1604
      %1607 = dma.vmem_to_hbm [thread:$0]  %s1603, 128, %s1605, [#allocation4]
    $region69: #{tpu_custom_call.1} parent=1 // pred_fallthru
      _
    // Predicated region
    $region70: #{tpu_custom_call.1} parent=1 // pred_check
      _
    $region71: #{tpu_custom_call.1} parent=1 // pred_check_branch
      %1609 = sbr.rel (0) target = $region73
    $region72: #{tpu_custom_call.1} parent=1 // pred_region
      %1611 = dma.done [#allocation4], 128
    $region73: #{tpu_custom_call.1} parent=1 // pred_fallthru
      _
    %1612 = vsyncpa [#allocation3], 1
    %1613 = vsyncpa [#allocation6], 1
    %1614 = vsyncpa [#allocation9], 1
    %1615 = vsyncpa [#allocation12], 1
    %1616 = vsyncpa [#allocation15], 1
    %1617 = vsyncpa [#allocation4], 1

</llo_original>
